<compile_context>
chip_gen: v6e
topology: v6e:2x2x1
jax: 0.10.0
libtpu: 0.0.40
codegen_flags: <defaults>
</compile_context>

<pallas_src>
import functools

import jax
import jax.numpy as jnp
from jax import lax
from jax.experimental import pallas as pl
from jax.experimental.pallas import tpu as pltpu

LEAKY_SLOPE = 0.01   # torch.nn.LeakyReLU default negative_slope
LN_EPS = 1e-5        # torch.nn.LayerNorm default eps
LANE = 128
SLAB = 256           # in-kernel row sub-slab size for large batch tiles


def _round_up(n, m):
    return (n + m - 1) // m * m


def _layer(h, w, b, gamma, beta, matmul_dtype, true_dim=None):
    """Linear -> LeakyReLU -> LayerNorm (one-pass stats, f32 elementwise).

    true_dim: real (unpadded) feature count for the LayerNorm statistics when
    the lane dimension has been zero-padded (padded gamma/beta/bias/weight
    columns must be exactly zero so padded lanes stay zero).
    """
    z = jnp.dot(h.astype(matmul_dtype), w,
                preferred_element_type=jnp.float32) + b
    z = jnp.where(z > 0, z, LEAKY_SLOPE * z)                    # LeakyReLU
    d = true_dim if true_dim is not None else z.shape[-1]
    inv_d = jnp.float32(1.0 / d)
    s = jnp.sum(z, axis=-1, keepdims=True)
    s2 = jnp.sum(z * z, axis=-1, keepdims=True)
    mu = s * inv_d
    var = jnp.maximum(s2 * inv_d - mu * mu, 0.0)                # biased var, >=0
    r = lax.rsqrt(var + LN_EPS)                                 # EUP slot
    return (z - mu) * (gamma * r) + beta
    # TODO(synk): Dropout(p=0.2) is identity in eval mode; training-mode RNG
    # masking is intentionally not implemented.


def mlp_kernel(x_ref,
               w1_ref, b1_ref, g1_ref, be1_ref,
               w2_ref, b2_ref, g2_ref, be2_ref,
               w3_ref, b3_ref, g3_ref, be3_ref,
               w4_ref, b4_ref, g4_ref, be4_ref,
               w5_ref, b5_ref,
               o_ref, *, matmul_dtype, d4_true, slab_rows):
    # Hoist all parameter loads out of the sub-slab loop (loaded once per tile).
    w1, b1, g1, be1 = w1_ref[...], b1_ref[...], g1_ref[...], be1_ref[...]
    w2, b2, g2, be2 = w2_ref[...], b2_ref[...], g2_ref[...], be2_ref[...]
    w3, b3, g3, be3 = w3_ref[...], b3_ref[...], g3_ref[...], be3_ref[...]
    w4, b4, g4, be4 = w4_ref[...], b4_ref[...], g4_ref[...], be4_ref[...]
    w5, b5 = w5_ref[...], b5_ref[...]

    def slab(r0):
        h = x_ref[pl.ds(r0, slab_rows), :]
        h = _layer(h, w1, b1, g1, be1, matmul_dtype)
        h = _layer(h, w2, b2, g2, be2, matmul_dtype)
        h = _layer(h, w3, b3, g3, be3, matmul_dtype)
        h = _layer(h, w4, b4, g4, be4, matmul_dtype, true_dim=d4_true)
        o_ref[pl.ds(r0, slab_rows), :] = (
            jnp.dot(h.astype(matmul_dtype), w5,
                    preferred_element_type=jnp.float32) + b5
        ).astype(o_ref.dtype)

    n_slabs = x_ref.shape[0] // slab_rows
    if n_slabs == 1:
        slab(0)
    else:
        def body(i, carry):
            slab(pl.multiple_of(i * slab_rows, slab_rows))
            return carry
        # Fully unrolled: indices fold to constants, slabs can overlap in the
        # LLO schedule (MXU of slab i with LN reductions of slab i-1).
        lax.fori_loop(0, n_slabs, body, 0, unroll=True)


def nn_5_1_forward(x, params, *, batch_tile=None, matmul_dtype=jnp.bfloat16):
    """x: (N, D_in) float32.  params: dict of (in,out) weights / (1,out) vecs.

    matmul_dtype=jnp.bfloat16 (default) runs the five matmuls on the bf16 MXU
    path with f32 accumulation; elementwise / LayerNorm math is always f32.
    Pass matmul_dtype=jnp.float32 for a bit-accurate f32 path.
    """
    N, D_in = x.shape

    # ---- batch tiling.
    #   small N (<= 256 rows): single grid step.
    #   large N: >= 2 grid steps (v7x: 2 TensorCores on the "parallel" axis),
    #   256-row-multiple tiles, capped at 2048 rows/step (VMEM stays tiny).
    if batch_tile is None:
        n_r8 = _round_up(max(N, 1), 8)
        if n_r8 <= 256:
            batch_tile = n_r8
        else:
            half = _round_up((n_r8 + 1) // 2, 256)
            batch_tile = min(2048, half)
    batch_tile = max(8, _round_up(batch_tile, 8))
    N_pad = _round_up(N, batch_tile)
    if N_pad != N:
        x = jnp.pad(x, ((0, N_pad - N), (0, 0)))

    # In-kernel row sub-slabs for large tiles (bounds live ranges / enables
    # MXU-vs-LayerNorm overlap across slabs).
    if batch_tile >= 2 * SLAB and batch_tile % SLAB == 0:
        slab_rows = SLAB
    else:
        slab_rows = batch_tile

    # ---- lane-dense hidden layer 4: pad the 64-wide fc4 output to 128 lanes.
    # Padded weight columns / bias / gamma / beta are exactly zero, so padded
    # lanes stay zero; LN stats use the true feature count (d4_true).
    w4, b4, g4, be4 = params["w4"], params["b4"], params["g4"], params["be4"]
    w5, b5 = params["w5"], params["b5"]
    d4_true = w4.shape[1]
    d4_pad = _round_up(d4_true, LANE)
    if d4_pad != d4_true:
        pad4 = d4_pad - d4_true
        w4 = jnp.pad(w4, ((0, 0), (0, pad4)))
        b4 = jnp.pad(b4, ((0, 0), (0, pad4)))
        g4 = jnp.pad(g4, ((0, 0), (0, pad4)))
        be4 = jnp.pad(be4, ((0, 0), (0, pad4)))
        w5 = jnp.pad(w5, ((0, pad4), (0, 0)))   # padded h lanes are zero anyway

    # ---- lane-dense output: pad D_out up to a full 128-lane vreg.
    D_out = params["w5"].shape[1]
    D_out_pad = _round_up(D_out, LANE)
    if D_out_pad != D_out:
        w5 = jnp.pad(w5, ((0, 0), (0, D_out_pad - D_out)))
        b5 = jnp.pad(b5, ((0, 0), (0, D_out_pad - D_out)))

    # Weight matrices in matmul dtype (bf16 halves weight DMA bytes and uses
    # the fast MXU path on all chips); biases / LN params stay f32.
    def wcast(w):
        return w.astype(matmul_dtype)

    plist = [
        wcast(params["w1"]), params["b1"], params["g1"], params["be1"],
        wcast(params["w2"]), params["b2"], params["g2"], params["be2"],
        wcast(params["w3"]), params["b3"], params["g3"], params["be3"],
        wcast(w4), b4, g4, be4,
        wcast(w5), b5,
    ]

    # Parameters use constant-index full-array blocks (not re-fetched per step).
    def full_spec(arr):
        return pl.BlockSpec(arr.shape, lambda i: (0, 0))

    grid = (N_pad // batch_tile,)
    out = pl.pallas_call(
        functools.partial(mlp_kernel, matmul_dtype=matmul_dtype,
                          d4_true=d4_true, slab_rows=slab_rows),
        out_shape=jax.ShapeDtypeStruct((N_pad, D_out_pad), jnp.float32),
        grid_spec=pltpu.PrefetchScalarGridSpec(
            num_scalar_prefetch=0,
            grid=grid,
            in_specs=[pl.BlockSpec((batch_tile, D_in), lambda i: (i, 0))]
                     + [full_spec(p) for p in plist],
            out_specs=pl.BlockSpec((batch_tile, D_out_pad), lambda i: (i, 0)),
        ),
        compiler_params=pltpu.CompilerParams(
            dimension_semantics=("parallel",),
            vmem_limit_bytes=32 * 1024 * 1024),
    )(x, *plist)
    return out[:N, :D_out]


def init_params(key, d_in, d_out):
    """Deterministic synthetic init.  Linear weights (in, out), biases (1, out),
    LayerNorm gamma~1 / beta=0."""
    dims = [d_in, 128, 256, 256, 64, d_out]
    params = {}
    keys = jax.random.split(key, 16)
    ki = 0
    for li in range(1, 6):  # fc1..fc4, fc_mu
        fan_in, fan_out = dims[li - 1], dims[li]
        w = jax.random.normal(keys[ki], (fan_in, fan_out), jnp.float32)
        w = w * (1.0 / jnp.sqrt(jnp.float32(fan_in)))
        ki += 1
        b = 0.01 * jax.random.normal(keys[ki], (1, fan_out), jnp.float32)
        ki += 1
        params[f"w{li}"] = w
        params[f"b{li}"] = b
        if li <= 4:  # LayerNorm params for bn1..bn4
            params[f"g{li}"] = jnp.ones((1, fan_out), jnp.float32) \
                + 0.05 * jax.random.normal(keys[ki], (1, fan_out), jnp.float32)
            ki += 1
            params[f"be{li}"] = jnp.zeros((1, fan_out), jnp.float32)
    return params


def reference_forward(x, p):
    """Pure-JAX reference for a sanity check (two-pass LayerNorm, f32)."""
    h = x
    for li in range(1, 5):
        z = h @ p[f"w{li}"] + p[f"b{li}"]
        z = jnp.where(z > 0, z, LEAKY_SLOPE * z)
        mu = jnp.mean(z, axis=-1, keepdims=True)
        var = jnp.mean((z - mu) ** 2, axis=-1, keepdims=True)
        z = (z - mu) / jnp.sqrt(var + LN_EPS)
        h = z * p[f"g{li}"] + p[f"be{li}"]
    return h @ p["w5"] + p["b5"]


if __name__ == "__main__":
    key = jax.random.PRNGKey(0)
    k_x, k_p, k_x2, k_x3 = jax.random.split(key, 4)

    N, D_in, D_out = 16, 16, 4          # small shapes: batch=16, features=16, targets=4
    x = jax.random.normal(k_x, (N, D_in), jnp.float32)
    params = init_params(k_p, D_in, D_out)
    ref = reference_forward(x, params)

    # 1) f32 MXU path, grid=(1,), tight tolerance.
    out_f32 = jax.block_until_ready(
        nn_5_1_forward(x, params, matmul_dtype=jnp.float32))
    assert out_f32.shape == (N, D_out)
    assert jnp.allclose(out_f32, ref, atol=2e-4, rtol=2e-4), "f32 mismatch vs reference"

    # 2) default bf16-MXU path (f32 accumulation + f32 LayerNorm).  Activations
    #    are re-quantized to bf16 at every layer, hence the loose tolerance.
    out_bf16 = jax.block_until_ready(nn_5_1_forward(x, params))
    assert out_bf16.shape == (N, D_out)
    assert bool(jnp.all(jnp.isfinite(out_bf16)))
    assert jnp.allclose(out_bf16, ref, atol=0.2, rtol=0.2), "bf16 path far off"

    # 3) explicit small batch_tile: multi-step grid + batch padding path.
    N2 = 40
    x2 = jax.random.normal(k_x2, (N2, D_in), jnp.float32)
    out2 = jax.block_until_ready(
        nn_5_1_forward(x2, params, batch_tile=16, matmul_dtype=jnp.float32))
    ref2 = reference_forward(x2, params)
    assert out2.shape == (N2, D_out)
    assert jnp.allclose(out2, ref2, atol=2e-4, rtol=2e-4), "tiled mismatch vs reference"

    # 4) larger N: auto tiling gives >= 2 grid steps (both v7x TCs) and the
    #    in-kernel 256-row sub-slab fori_loop path.
    N3 = 600
    x3 = jax.random.normal(k_x3, (N3, D_in), jnp.float32)
    out3 = jax.block_until_ready(
        nn_5_1_forward(x3, params, matmul_dtype=jnp.float32))
    ref3 = reference_forward(x3, params)
    assert out3.shape == (N3, D_out)
    assert jnp.allclose(out3, ref3, atol=3e-4, rtol=3e-4), "large-N mismatch vs reference"

    print("KERNEL_OK")
</pallas_src>

<mosaic_0001>
module attributes {stable_mosaic.version = 11 : i64} {
  func.func @mlp_kernel(%arg0: i32, %arg1: memref<16x16xf32, #tpu.memory_space<vmem>>, %arg2: memref<16x128xf32, #tpu.memory_space<vmem>>, %arg3: memref<1x128xf32, #tpu.memory_space<vmem>>, %arg4: memref<1x128xf32, #tpu.memory_space<vmem>>, %arg5: memref<1x128xf32, #tpu.memory_space<vmem>>, %arg6: memref<128x256xf32, #tpu.memory_space<vmem>>, %arg7: memref<1x256xf32, #tpu.memory_space<vmem>>, %arg8: memref<1x256xf32, #tpu.memory_space<vmem>>, %arg9: memref<1x256xf32, #tpu.memory_space<vmem>>, %arg10: memref<256x256xf32, #tpu.memory_space<vmem>>, %arg11: memref<1x256xf32, #tpu.memory_space<vmem>>, %arg12: memref<1x256xf32, #tpu.memory_space<vmem>>, %arg13: memref<1x256xf32, #tpu.memory_space<vmem>>, %arg14: memref<256x128xf32, #tpu.memory_space<vmem>>, %arg15: memref<1x128xf32, #tpu.memory_space<vmem>>, %arg16: memref<1x128xf32, #tpu.memory_space<vmem>>, %arg17: memref<1x128xf32, #tpu.memory_space<vmem>>, %arg18: memref<128x128xf32, #tpu.memory_space<vmem>>, %arg19: memref<1x128xf32, #tpu.memory_space<vmem>>, %arg20: memref<16x128xf32, #tpu.memory_space<vmem>>) attributes {dimension_semantics = [#tpu.dimension_semantics<parallel>], iteration_bounds = array<i64: 1>, scalar_prefetch = 0 : i64, scratch_operands = 0 : i64, tpu.core_type = #tpu.core_type<tc>, window_params = [{transform_indices = @transform_0, window_bounds = array<i64: 16, 16>}, {pipeline_mode = #tpu.pipeline_mode<synchronous>, transform_indices = @transform_1, window_bounds = array<i64: 16, 128>}, {pipeline_mode = #tpu.pipeline_mode<synchronous>, transform_indices = @transform_2, window_bounds = array<i64: 1, 128>}, {pipeline_mode = #tpu.pipeline_mode<synchronous>, transform_indices = @transform_3, window_bounds = array<i64: 1, 128>}, {pipeline_mode = #tpu.pipeline_mode<synchronous>, transform_indices = @transform_4, window_bounds = array<i64: 1, 128>}, {pipeline_mode = #tpu.pipeline_mode<synchronous>, transform_indices = @transform_5, window_bounds = array<i64: 128, 256>}, {pipeline_mode = #tpu.pipeline_mode<synchronous>, transform_indices = @transform_6, window_bounds = array<i64: 1, 256>}, {pipeline_mode = #tpu.pipeline_mode<synchronous>, transform_indices = @transform_7, window_bounds = array<i64: 1, 256>}, {pipeline_mode = #tpu.pipeline_mode<synchronous>, transform_indices = @transform_8, window_bounds = array<i64: 1, 256>}, {pipeline_mode = #tpu.pipeline_mode<synchronous>, transform_indices = @transform_9, window_bounds = array<i64: 256, 256>}, {pipeline_mode = #tpu.pipeline_mode<synchronous>, transform_indices = @transform_10, window_bounds = array<i64: 1, 256>}, {pipeline_mode = #tpu.pipeline_mode<synchronous>, transform_indices = @transform_11, window_bounds = array<i64: 1, 256>}, {pipeline_mode = #tpu.pipeline_mode<synchronous>, transform_indices = @transform_12, window_bounds = array<i64: 1, 256>}, {pipeline_mode = #tpu.pipeline_mode<synchronous>, transform_indices = @transform_13, window_bounds = array<i64: 256, 128>}, {pipeline_mode = #tpu.pipeline_mode<synchronous>, transform_indices = @transform_14, window_bounds = array<i64: 1, 128>}, {pipeline_mode = #tpu.pipeline_mode<synchronous>, transform_indices = @transform_15, window_bounds = array<i64: 1, 128>}, {pipeline_mode = #tpu.pipeline_mode<synchronous>, transform_indices = @transform_16, window_bounds = array<i64: 1, 128>}, {pipeline_mode = #tpu.pipeline_mode<synchronous>, transform_indices = @transform_17, window_bounds = array<i64: 128, 128>}, {pipeline_mode = #tpu.pipeline_mode<synchronous>, transform_indices = @transform_18, window_bounds = array<i64: 1, 128>}, {transform_indices = @transform_19, window_bounds = array<i64: 16, 128>}]} {
    %c0 = arith.constant 0 : index
    %c0_0 = arith.constant 0 : index
    %0 = vector.load %arg2[%c0, %c0_0] : memref<16x128xf32, #tpu.memory_space<vmem>>, vector<16x128xf32>
    %c0_1 = arith.constant 0 : index
    %c0_2 = arith.constant 0 : index
    %1 = vector.load %arg3[%c0_1, %c0_2] : memref<1x128xf32, #tpu.memory_space<vmem>>, vector<1x128xf32>
    %c0_3 = arith.constant 0 : index
    %c0_4 = arith.constant 0 : index
    %2 = vector.load %arg4[%c0_3, %c0_4] : memref<1x128xf32, #tpu.memory_space<vmem>>, vector<1x128xf32>
    %c0_5 = arith.constant 0 : index
    %c0_6 = arith.constant 0 : index
    %3 = vector.load %arg5[%c0_5, %c0_6] : memref<1x128xf32, #tpu.memory_space<vmem>>, vector<1x128xf32>
    %c0_7 = arith.constant 0 : index
    %c0_8 = arith.constant 0 : index
    %4 = vector.load %arg6[%c0_7, %c0_8] : memref<128x256xf32, #tpu.memory_space<vmem>>, vector<128x256xf32>
    %c0_9 = arith.constant 0 : index
    %c0_10 = arith.constant 0 : index
    %5 = vector.load %arg7[%c0_9, %c0_10] : memref<1x256xf32, #tpu.memory_space<vmem>>, vector<1x256xf32>
    %c0_11 = arith.constant 0 : index
    %c0_12 = arith.constant 0 : index
    %6 = vector.load %arg8[%c0_11, %c0_12] : memref<1x256xf32, #tpu.memory_space<vmem>>, vector<1x256xf32>
    %c0_13 = arith.constant 0 : index
    %c0_14 = arith.constant 0 : index
    %7 = vector.load %arg9[%c0_13, %c0_14] : memref<1x256xf32, #tpu.memory_space<vmem>>, vector<1x256xf32>
    %c0_15 = arith.constant 0 : index
    %c0_16 = arith.constant 0 : index
    %8 = vector.load %arg10[%c0_15, %c0_16] : memref<256x256xf32, #tpu.memory_space<vmem>>, vector<256x256xf32>
    %c0_17 = arith.constant 0 : index
    %c0_18 = arith.constant 0 : index
    %9 = vector.load %arg11[%c0_17, %c0_18] : memref<1x256xf32, #tpu.memory_space<vmem>>, vector<1x256xf32>
    %c0_19 = arith.constant 0 : index
    %c0_20 = arith.constant 0 : index
    %10 = vector.load %arg12[%c0_19, %c0_20] : memref<1x256xf32, #tpu.memory_space<vmem>>, vector<1x256xf32>
    %c0_21 = arith.constant 0 : index
    %c0_22 = arith.constant 0 : index
    %11 = vector.load %arg13[%c0_21, %c0_22] : memref<1x256xf32, #tpu.memory_space<vmem>>, vector<1x256xf32>
    %c0_23 = arith.constant 0 : index
    %c0_24 = arith.constant 0 : index
    %12 = vector.load %arg14[%c0_23, %c0_24] : memref<256x128xf32, #tpu.memory_space<vmem>>, vector<256x128xf32>
    %c0_25 = arith.constant 0 : index
    %c0_26 = arith.constant 0 : index
    %13 = vector.load %arg15[%c0_25, %c0_26] : memref<1x128xf32, #tpu.memory_space<vmem>>, vector<1x128xf32>
    %c0_27 = arith.constant 0 : index
    %c0_28 = arith.constant 0 : index
    %14 = vector.load %arg16[%c0_27, %c0_28] : memref<1x128xf32, #tpu.memory_space<vmem>>, vector<1x128xf32>
    %c0_29 = arith.constant 0 : index
    %c0_30 = arith.constant 0 : index
    %15 = vector.load %arg17[%c0_29, %c0_30] : memref<1x128xf32, #tpu.memory_space<vmem>>, vector<1x128xf32>
    %c0_31 = arith.constant 0 : index
    %c0_32 = arith.constant 0 : index
    %16 = vector.load %arg18[%c0_31, %c0_32] : memref<128x128xf32, #tpu.memory_space<vmem>>, vector<128x128xf32>
    %c0_33 = arith.constant 0 : index
    %c0_34 = arith.constant 0 : index
    %17 = vector.load %arg19[%c0_33, %c0_34] : memref<1x128xf32, #tpu.memory_space<vmem>>, vector<1x128xf32>
    %c0_35 = arith.constant 0 : index
    %c0_36 = arith.constant 0 : index
    %18 = vector.load %arg1[%c0_35, %c0_36] : memref<16x16xf32, #tpu.memory_space<vmem>>, vector<16x16xf32>
    %cst = arith.constant dense<0.000000e+00> : vector<16x128xf32>
    %19 = tpu.matmul %18, %0, %cst {dimension_numbers = #tpu.dot_dimension_numbers<[1], [0], [0], [1], [0, 0, 1, 1], [], []>} : vector<16x16xf32>, vector<16x128xf32>, vector<16x128xf32> -> vector<16x128xf32>
    %20 = vector.broadcast %1 : vector<1x128xf32> to vector<16x128xf32>
    %21 = arith.addf %19, %20 : vector<16x128xf32>
    %cst_37 = arith.constant 0.000000e+00 : f32
    %22 = vector.broadcast %cst_37 : f32 to vector<16x128xf32>
    %23 = arith.cmpf ogt, %21, %22 : vector<16x128xf32>
    %cst_38 = arith.constant 0.00999999977 : f32
    %24 = vector.broadcast %cst_38 : f32 to vector<16x128xf32>
    %25 = arith.mulf %24, %21 : vector<16x128xf32>
    %26 = arith.select %23, %21, %25 : vector<16x128xi1>, vector<16x128xf32>
    %cst_39 = arith.constant dense<0.000000e+00> : vector<16xf32>
    %27 = vector.multi_reduction <add>, %26, %cst_39 [1] : vector<16x128xf32> to vector<16xf32>
    %28 = vector.shape_cast %27 : vector<16xf32> to vector<16x1xf32>
    %29 = arith.mulf %26, %26 : vector<16x128xf32>
    %cst_40 = arith.constant dense<0.000000e+00> : vector<16xf32>
    %30 = vector.multi_reduction <add>, %29, %cst_40 [1] : vector<16x128xf32> to vector<16xf32>
    %31 = vector.shape_cast %30 : vector<16xf32> to vector<16x1xf32>
    %cst_41 = arith.constant 7.812500e-03 : f32
    %32 = vector.broadcast %cst_41 : f32 to vector<16x1xf32>
    %33 = arith.mulf %28, %32 : vector<16x1xf32>
    %cst_42 = arith.constant 7.812500e-03 : f32
    %34 = vector.broadcast %cst_42 : f32 to vector<16x1xf32>
    %35 = arith.mulf %31, %34 : vector<16x1xf32>
    %36 = arith.mulf %33, %33 : vector<16x1xf32>
    %37 = arith.subf %35, %36 : vector<16x1xf32>
    %cst_43 = arith.constant 0.000000e+00 : f32
    %38 = vector.broadcast %cst_43 : f32 to vector<16x1xf32>
    %39 = arith.maximumf %37, %38 : vector<16x1xf32>
    %cst_44 = arith.constant 9.99999974E-6 : f32
    %40 = vector.broadcast %cst_44 : f32 to vector<16x1xf32>
    %41 = arith.addf %39, %40 : vector<16x1xf32>
    %42 = math.rsqrt %41 : vector<16x1xf32>
    %43 = vector.broadcast %33 : vector<16x1xf32> to vector<16x128xf32>
    %44 = arith.subf %26, %43 : vector<16x128xf32>
    %45 = vector.broadcast %2 : vector<1x128xf32> to vector<16x128xf32>
    %46 = vector.broadcast %42 : vector<16x1xf32> to vector<16x128xf32>
    %47 = arith.mulf %45, %46 : vector<16x128xf32>
    %48 = arith.mulf %44, %47 : vector<16x128xf32>
    %49 = vector.broadcast %3 : vector<1x128xf32> to vector<16x128xf32>
    %50 = arith.addf %48, %49 : vector<16x128xf32>
    %cst_45 = arith.constant dense<0.000000e+00> : vector<16x256xf32>
    %51 = tpu.matmul %50, %4, %cst_45 {dimension_numbers = #tpu.dot_dimension_numbers<[1], [0], [0], [1], [0, 0, 1, 1], [], []>} : vector<16x128xf32>, vector<128x256xf32>, vector<16x256xf32> -> vector<16x256xf32>
    %52 = vector.broadcast %5 : vector<1x256xf32> to vector<16x256xf32>
    %53 = arith.addf %51, %52 : vector<16x256xf32>
    %cst_46 = arith.constant 0.000000e+00 : f32
    %54 = vector.broadcast %cst_46 : f32 to vector<16x256xf32>
    %55 = arith.cmpf ogt, %53, %54 : vector<16x256xf32>
    %cst_47 = arith.constant 0.00999999977 : f32
    %56 = vector.broadcast %cst_47 : f32 to vector<16x256xf32>
    %57 = arith.mulf %56, %53 : vector<16x256xf32>
    %58 = arith.select %55, %53, %57 : vector<16x256xi1>, vector<16x256xf32>
    %cst_48 = arith.constant dense<0.000000e+00> : vector<16xf32>
    %59 = vector.multi_reduction <add>, %58, %cst_48 [1] : vector<16x256xf32> to vector<16xf32>
    %60 = vector.shape_cast %59 : vector<16xf32> to vector<16x1xf32>
    %61 = arith.mulf %58, %58 : vector<16x256xf32>
    %cst_49 = arith.constant dense<0.000000e+00> : vector<16xf32>
    %62 = vector.multi_reduction <add>, %61, %cst_49 [1] : vector<16x256xf32> to vector<16xf32>
    %63 = vector.shape_cast %62 : vector<16xf32> to vector<16x1xf32>
    %cst_50 = arith.constant 3.906250e-03 : f32
    %64 = vector.broadcast %cst_50 : f32 to vector<16x1xf32>
    %65 = arith.mulf %60, %64 : vector<16x1xf32>
    %cst_51 = arith.constant 3.906250e-03 : f32
    %66 = vector.broadcast %cst_51 : f32 to vector<16x1xf32>
    %67 = arith.mulf %63, %66 : vector<16x1xf32>
    %68 = arith.mulf %65, %65 : vector<16x1xf32>
    %69 = arith.subf %67, %68 : vector<16x1xf32>
    %cst_52 = arith.constant 0.000000e+00 : f32
    %70 = vector.broadcast %cst_52 : f32 to vector<16x1xf32>
    %71 = arith.maximumf %69, %70 : vector<16x1xf32>
    %cst_53 = arith.constant 9.99999974E-6 : f32
    %72 = vector.broadcast %cst_53 : f32 to vector<16x1xf32>
    %73 = arith.addf %71, %72 : vector<16x1xf32>
    %74 = math.rsqrt %73 : vector<16x1xf32>
    %75 = vector.broadcast %65 : vector<16x1xf32> to vector<16x256xf32>
    %76 = arith.subf %58, %75 : vector<16x256xf32>
    %77 = vector.broadcast %6 : vector<1x256xf32> to vector<16x256xf32>
    %78 = vector.broadcast %74 : vector<16x1xf32> to vector<16x256xf32>
    %79 = arith.mulf %77, %78 : vector<16x256xf32>
    %80 = arith.mulf %76, %79 : vector<16x256xf32>
    %81 = vector.broadcast %7 : vector<1x256xf32> to vector<16x256xf32>
    %82 = arith.addf %80, %81 : vector<16x256xf32>
    %cst_54 = arith.constant dense<0.000000e+00> : vector<16x256xf32>
    %83 = tpu.matmul %82, %8, %cst_54 {dimension_numbers = #tpu.dot_dimension_numbers<[1], [0], [0], [1], [0, 0, 1, 1], [], []>} : vector<16x256xf32>, vector<256x256xf32>, vector<16x256xf32> -> vector<16x256xf32>
    %84 = vector.broadcast %9 : vector<1x256xf32> to vector<16x256xf32>
    %85 = arith.addf %83, %84 : vector<16x256xf32>
    %cst_55 = arith.constant 0.000000e+00 : f32
    %86 = vector.broadcast %cst_55 : f32 to vector<16x256xf32>
    %87 = arith.cmpf ogt, %85, %86 : vector<16x256xf32>
    %cst_56 = arith.constant 0.00999999977 : f32
    %88 = vector.broadcast %cst_56 : f32 to vector<16x256xf32>
    %89 = arith.mulf %88, %85 : vector<16x256xf32>
    %90 = arith.select %87, %85, %89 : vector<16x256xi1>, vector<16x256xf32>
    %cst_57 = arith.constant dense<0.000000e+00> : vector<16xf32>
    %91 = vector.multi_reduction <add>, %90, %cst_57 [1] : vector<16x256xf32> to vector<16xf32>
    %92 = vector.shape_cast %91 : vector<16xf32> to vector<16x1xf32>
    %93 = arith.mulf %90, %90 : vector<16x256xf32>
    %cst_58 = arith.constant dense<0.000000e+00> : vector<16xf32>
    %94 = vector.multi_reduction <add>, %93, %cst_58 [1] : vector<16x256xf32> to vector<16xf32>
    %95 = vector.shape_cast %94 : vector<16xf32> to vector<16x1xf32>
    %cst_59 = arith.constant 3.906250e-03 : f32
    %96 = vector.broadcast %cst_59 : f32 to vector<16x1xf32>
    %97 = arith.mulf %92, %96 : vector<16x1xf32>
    %cst_60 = arith.constant 3.906250e-03 : f32
    %98 = vector.broadcast %cst_60 : f32 to vector<16x1xf32>
    %99 = arith.mulf %95, %98 : vector<16x1xf32>
    %100 = arith.mulf %97, %97 : vector<16x1xf32>
    %101 = arith.subf %99, %100 : vector<16x1xf32>
    %cst_61 = arith.constant 0.000000e+00 : f32
    %102 = vector.broadcast %cst_61 : f32 to vector<16x1xf32>
    %103 = arith.maximumf %101, %102 : vector<16x1xf32>
    %cst_62 = arith.constant 9.99999974E-6 : f32
    %104 = vector.broadcast %cst_62 : f32 to vector<16x1xf32>
    %105 = arith.addf %103, %104 : vector<16x1xf32>
    %106 = math.rsqrt %105 : vector<16x1xf32>
    %107 = vector.broadcast %97 : vector<16x1xf32> to vector<16x256xf32>
    %108 = arith.subf %90, %107 : vector<16x256xf32>
    %109 = vector.broadcast %10 : vector<1x256xf32> to vector<16x256xf32>
    %110 = vector.broadcast %106 : vector<16x1xf32> to vector<16x256xf32>
    %111 = arith.mulf %109, %110 : vector<16x256xf32>
    %112 = arith.mulf %108, %111 : vector<16x256xf32>
    %113 = vector.broadcast %11 : vector<1x256xf32> to vector<16x256xf32>
    %114 = arith.addf %112, %113 : vector<16x256xf32>
    %cst_63 = arith.constant dense<0.000000e+00> : vector<16x128xf32>
    %115 = tpu.matmul %114, %12, %cst_63 {dimension_numbers = #tpu.dot_dimension_numbers<[1], [0], [0], [1], [0, 0, 1, 1], [], []>} : vector<16x256xf32>, vector<256x128xf32>, vector<16x128xf32> -> vector<16x128xf32>
    %116 = vector.broadcast %13 : vector<1x128xf32> to vector<16x128xf32>
    %117 = arith.addf %115, %116 : vector<16x128xf32>
    %cst_64 = arith.constant 0.000000e+00 : f32
    %118 = vector.broadcast %cst_64 : f32 to vector<16x128xf32>
    %119 = arith.cmpf ogt, %117, %118 : vector<16x128xf32>
    %cst_65 = arith.constant 0.00999999977 : f32
    %120 = vector.broadcast %cst_65 : f32 to vector<16x128xf32>
    %121 = arith.mulf %120, %117 : vector<16x128xf32>
    %122 = arith.select %119, %117, %121 : vector<16x128xi1>, vector<16x128xf32>
    %cst_66 = arith.constant dense<0.000000e+00> : vector<16xf32>
    %123 = vector.multi_reduction <add>, %122, %cst_66 [1] : vector<16x128xf32> to vector<16xf32>
    %124 = vector.shape_cast %123 : vector<16xf32> to vector<16x1xf32>
    %125 = arith.mulf %122, %122 : vector<16x128xf32>
    %cst_67 = arith.constant dense<0.000000e+00> : vector<16xf32>
    %126 = vector.multi_reduction <add>, %125, %cst_67 [1] : vector<16x128xf32> to vector<16xf32>
    %127 = vector.shape_cast %126 : vector<16xf32> to vector<16x1xf32>
    %cst_68 = arith.constant 1.562500e-02 : f32
    %128 = vector.broadcast %cst_68 : f32 to vector<16x1xf32>
    %129 = arith.mulf %124, %128 : vector<16x1xf32>
    %cst_69 = arith.constant 1.562500e-02 : f32
    %130 = vector.broadcast %cst_69 : f32 to vector<16x1xf32>
    %131 = arith.mulf %127, %130 : vector<16x1xf32>
    %132 = arith.mulf %129, %129 : vector<16x1xf32>
    %133 = arith.subf %131, %132 : vector<16x1xf32>
    %cst_70 = arith.constant 0.000000e+00 : f32
    %134 = vector.broadcast %cst_70 : f32 to vector<16x1xf32>
    %135 = arith.maximumf %133, %134 : vector<16x1xf32>
    %cst_71 = arith.constant 9.99999974E-6 : f32
    %136 = vector.broadcast %cst_71 : f32 to vector<16x1xf32>
    %137 = arith.addf %135, %136 : vector<16x1xf32>
    %138 = math.rsqrt %137 : vector<16x1xf32>
    %139 = vector.broadcast %129 : vector<16x1xf32> to vector<16x128xf32>
    %140 = arith.subf %122, %139 : vector<16x128xf32>
    %141 = vector.broadcast %14 : vector<1x128xf32> to vector<16x128xf32>
    %142 = vector.broadcast %138 : vector<16x1xf32> to vector<16x128xf32>
    %143 = arith.mulf %141, %142 : vector<16x128xf32>
    %144 = arith.mulf %140, %143 : vector<16x128xf32>
    %145 = vector.broadcast %15 : vector<1x128xf32> to vector<16x128xf32>
    %146 = arith.addf %144, %145 : vector<16x128xf32>
    %cst_72 = arith.constant dense<0.000000e+00> : vector<16x128xf32>
    %147 = tpu.matmul %146, %16, %cst_72 {dimension_numbers = #tpu.dot_dimension_numbers<[1], [0], [0], [1], [0, 0, 1, 1], [], []>} : vector<16x128xf32>, vector<128x128xf32>, vector<16x128xf32> -> vector<16x128xf32>
    %148 = vector.broadcast %17 : vector<1x128xf32> to vector<16x128xf32>
    %149 = arith.addf %147, %148 : vector<16x128xf32>
    %c0_73 = arith.constant 0 : index
    %c0_74 = arith.constant 0 : index
    %150 = vector.load %arg20[%c0_73, %c0_74] : memref<16x128xf32, #tpu.memory_space<vmem>>, vector<16x128xf32>
    tpu.vector_store %arg20[%c0_73, %c0_74], %149 {strides = array<i32>} : memref<16x128xf32, #tpu.memory_space<vmem>>, vector<16x128xf32>,
    return
  }
  func.func @transform_0(%arg0: i32) -> (i32, i32) {
    %c0_i32 = arith.constant 0 : i32
    %c0_i32_0 = arith.constant 0 : i32
    return %arg0, %c0_i32 : i32, i32
  }
  func.func @transform_1(%arg0: i32) -> (i32, i32) {
    %c0_i32 = arith.constant 0 : i32
    %c0_i32_0 = arith.constant 0 : i32
    %c0_i32_1 = arith.constant 0 : i32
    return %c0_i32, %c0_i32_0 : i32, i32
  }
  func.func @transform_2(%arg0: i32) -> (i32, i32) {
    %c0_i32 = arith.constant 0 : i32
    %c0_i32_0 = arith.constant 0 : i32
    %c0_i32_1 = arith.constant 0 : i32
    return %c0_i32, %c0_i32_0 : i32, i32
  }
  func.func @transform_3(%arg0: i32) -> (i32, i32) {
    %c0_i32 = arith.constant 0 : i32
    %c0_i32_0 = arith.constant 0 : i32
    %c0_i32_1 = arith.constant 0 : i32
    return %c0_i32, %c0_i32_0 : i32, i32
  }
  func.func @transform_4(%arg0: i32) -> (i32, i32) {
    %c0_i32 = arith.constant 0 : i32
    %c0_i32_0 = arith.constant 0 : i32
    %c0_i32_1 = arith.constant 0 : i32
    return %c0_i32, %c0_i32_0 : i32, i32
  }
  func.func @transform_5(%arg0: i32) -> (i32, i32) {
    %c0_i32 = arith.constant 0 : i32
    %c0_i32_0 = arith.constant 0 : i32
    %c0_i32_1 = arith.constant 0 : i32
    return %c0_i32, %c0_i32_0 : i32, i32
  }
  func.func @transform_6(%arg0: i32) -> (i32, i32) {
    %c0_i32 = arith.constant 0 : i32
    %c0_i32_0 = arith.constant 0 : i32
    %c0_i32_1 = arith.constant 0 : i32
    return %c0_i32, %c0_i32_0 : i32, i32
  }
  func.func @transform_7(%arg0: i32) -> (i32, i32) {
    %c0_i32 = arith.constant 0 : i32
    %c0_i32_0 = arith.constant 0 : i32
    %c0_i32_1 = arith.constant 0 : i32
    return %c0_i32, %c0_i32_0 : i32, i32
  }
  func.func @transform_8(%arg0: i32) -> (i32, i32) {
    %c0_i32 = arith.constant 0 : i32
    %c0_i32_0 = arith.constant 0 : i32
    %c0_i32_1 = arith.constant 0 : i32
    return %c0_i32, %c0_i32_0 : i32, i32
  }
  func.func @transform_9(%arg0: i32) -> (i32, i32) {
    %c0_i32 = arith.constant 0 : i32
    %c0_i32_0 = arith.constant 0 : i32
    %c0_i32_1 = arith.constant 0 : i32
    return %c0_i32, %c0_i32_0 : i32, i32
  }
  func.func @transform_10(%arg0: i32) -> (i32, i32) {
    %c0_i32 = arith.constant 0 : i32
    %c0_i32_0 = arith.constant 0 : i32
    %c0_i32_1 = arith.constant 0 : i32
    return %c0_i32, %c0_i32_0 : i32, i32
  }
  func.func @transform_11(%arg0: i32) -> (i32, i32) {
    %c0_i32 = arith.constant 0 : i32
    %c0_i32_0 = arith.constant 0 : i32
    %c0_i32_1 = arith.constant 0 : i32
    return %c0_i32, %c0_i32_0 : i32, i32
  }
  func.func @transform_12(%arg0: i32) -> (i32, i32) {
    %c0_i32 = arith.constant 0 : i32
    %c0_i32_0 = arith.constant 0 : i32
    %c0_i32_1 = arith.constant 0 : i32
    return %c0_i32, %c0_i32_0 : i32, i32
  }
  func.func @transform_13(%arg0: i32) -> (i32, i32) {
    %c0_i32 = arith.constant 0 : i32
    %c0_i32_0 = arith.constant 0 : i32
    %c0_i32_1 = arith.constant 0 : i32
    return %c0_i32, %c0_i32_0 : i32, i32
  }
  func.func @transform_14(%arg0: i32) -> (i32, i32) {
    %c0_i32 = arith.constant 0 : i32
    %c0_i32_0 = arith.constant 0 : i32
    %c0_i32_1 = arith.constant 0 : i32
    return %c0_i32, %c0_i32_0 : i32, i32
  }
  func.func @transform_15(%arg0: i32) -> (i32, i32) {
    %c0_i32 = arith.constant 0 : i32
    %c0_i32_0 = arith.constant 0 : i32
    %c0_i32_1 = arith.constant 0 : i32
    return %c0_i32, %c0_i32_0 : i32, i32
  }
  func.func @transform_16(%arg0: i32) -> (i32, i32) {
    %c0_i32 = arith.constant 0 : i32
    %c0_i32_0 = arith.constant 0 : i32
    %c0_i32_1 = arith.constant 0 : i32
    return %c0_i32, %c0_i32_0 : i32, i32
  }
  func.func @transform_17(%arg0: i32) -> (i32, i32) {
    %c0_i32 = arith.constant 0 : i32
    %c0_i32_0 = arith.constant 0 : i32
    %c0_i32_1 = arith.constant 0 : i32
    return %c0_i32, %c0_i32_0 : i32, i32
  }
  func.func @transform_18(%arg0: i32) -> (i32, i32) {
    %c0_i32 = arith.constant 0 : i32
    %c0_i32_0 = arith.constant 0 : i32
    %c0_i32_1 = arith.constant 0 : i32
    return %c0_i32, %c0_i32_0 : i32, i32
  }
  func.func @transform_19(%arg0: i32) -> (i32, i32) {
    %c0_i32 = arith.constant 0 : i32
    %c0_i32_0 = arith.constant 0 : i32
    return %arg0, %c0_i32 : i32, i32
  }
}

</mosaic_0001>

<llo_original>
// kernel: tpu_custom_call.1
$region0: #{tpu_custom_call.1}
  #allocation0 [shape = 'u32[]', space=smem, size = 0x4, offset = 0x4, fixed_abs, tag = 'smem constant byte address 0x4 - core index']
  #allocation1 [shape = 'u32[144,128]{1,0:T(1,128)}', space=vmem, size = 0x12000, scoped, tag = 'internal scratch']
  %s0 = inlined_call_operand.hbm [shape: f32[16,16], index: 0, kind: input, shape index: {}]
  %s1 = inlined_call_operand.hbm [shape: f32[16,128], index: 1, kind: input, shape index: {}]
  %s2 = inlined_call_operand.hbm [shape: f32[1,128], index: 2, kind: input, shape index: {}]
  %s3 = inlined_call_operand.hbm [shape: f32[1,128], index: 3, kind: input, shape index: {}]
  %s4 = inlined_call_operand.hbm [shape: f32[1,128], index: 4, kind: input, shape index: {}]
  %s5 = inlined_call_operand.hbm [shape: f32[128,256], index: 5, kind: input, shape index: {}]
  %s6 = inlined_call_operand.vmem [shape: f32[1,256], index: 6, kind: input, shape index: {}]
  %s7 = inlined_call_operand.vmem [shape: f32[1,256], index: 7, kind: input, shape index: {}]
  %s8 = inlined_call_operand.vmem [shape: f32[1,256], index: 8, kind: input, shape index: {}]
  %s9 = inlined_call_operand.hbm [shape: f32[256,256], index: 9, kind: input, shape index: {}]
  %s10 = inlined_call_operand.vmem [shape: f32[1,256], index: 10, kind: input, shape index: {}]
  %s11 = inlined_call_operand.vmem [shape: f32[1,256], index: 11, kind: input, shape index: {}]
  %s12 = inlined_call_operand.vmem [shape: f32[1,256], index: 12, kind: input, shape index: {}]
  %s13 = inlined_call_operand.hbm [shape: f32[256,128], index: 13, kind: input, shape index: {}]
  %s14 = inlined_call_operand.vmem [shape: f32[1,128], index: 14, kind: input, shape index: {}]
  %s15 = inlined_call_operand.vmem [shape: f32[1,128], index: 15, kind: input, shape index: {}]
  %s16 = inlined_call_operand.vmem [shape: f32[1,128], index: 16, kind: input, shape index: {}]
  %s17 = inlined_call_operand.hbm [shape: f32[128,128], index: 17, kind: input, shape index: {}]
  %s18 = inlined_call_operand.vmem [shape: f32[1,128], index: 18, kind: input, shape index: {}]
  %s19 = inlined_call_operand.hbm [shape: f32[16,128], index: 19, kind: output, shape index: {}]
  %s20 = sld [smem:[#allocation0]]
  $region122: #{tpu_custom_call.1} parent=0
    _
  %s22 = ssub.s32 1, %s20
  %s23 = scalar_select 0, %s22, %s20
  $region1: #{tpu_custom_call.1} parent=0
    #allocation2 [shape = 'u8[8192]{0}', space=vmem, size = 0x2000, scoped, tag = 'input window, operand 0, single buffered']
    #allocation3 [shape = 's32[1]{0}', space=sflag, size = 0x4, scoped, tag = 'scoped memory for tpu_custom_call.1']
    #allocation4 [shape = 's32[1]{0}', space=sflag, size = 0x4, scoped, tag = 'scoped memory for tpu_custom_call.1']
    #allocation5 [shape = 'u8[8192]{0}', space=vmem, size = 0x2000, scoped, tag = 'input window, operand 1, single buffered']
    #allocation6 [shape = 's32[1]{0}', space=sflag, size = 0x4, scoped, tag = 'scoped memory for tpu_custom_call.1']
    #allocation7 [shape = 'u8[512]{0}', space=vmem, size = 0x400, scoped, tag = 'input window, operand 2, single buffered']
    #allocation8 [shape = 'u8[512]{0}', space=vmem, size = 0x400, scoped, tag = 'input window, operand 3, single buffered']
    #allocation9 [shape = 's32[1]{0}', space=sflag, size = 0x4, scoped, tag = 'scoped memory for tpu_custom_call.1']
    #allocation10 [shape = 'u8[512]{0}', space=vmem, size = 0x400, scoped, tag = 'input window, operand 4, single buffered']
    #allocation11 [shape = 'u8[131072]{0}', space=vmem, size = 0x20000, scoped, tag = 'input window, operand 5, single buffered']
    #allocation12 [shape = 's32[1]{0}', space=sflag, size = 0x4, scoped, tag = 'scoped memory for tpu_custom_call.1']
    #allocation13 [shape = 'u8[262144]{0}', space=vmem, size = 0x40000, scoped, tag = 'input window, operand 9, single buffered']
    #allocation14 [shape = 'u8[131072]{0}', space=vmem, size = 0x20000, scoped, tag = 'input window, operand 13, single buffered']
    #allocation15 [shape = 's32[1]{0}', space=sflag, size = 0x4, scoped, tag = 'scoped memory for tpu_custom_call.1']
    #allocation16 [shape = 'u8[65536]{0}', space=vmem, size = 0x10000, scoped, tag = 'input window, operand 17, single buffered']
    #allocation17 [shape = 'u8[8192]{0}', space=vmem, size = 0x2000, scoped, tag = 'output window, operand 0, single buffered']
    %24 = vsyncpa [#allocation3], 0
    %25 = vsyncpa [#allocation6], 0
    %26 = vsyncpa [#allocation9], 0
    %27 = vsyncpa [#allocation12], 0
    %28 = vsyncpa [#allocation15], 0
    %29 = vsyncpa [#allocation4], 0
    // Predicated region
    $region2: #{tpu_custom_call.1} parent=1 // pred_check
      _
    $region3: #{tpu_custom_call.1} parent=1 // pred_check_branch
      %31 = sbr.rel (0) target = $region5
    $region4: #{tpu_custom_call.1} parent=1 // pred_region
      %s33 = ssub.s32 256, 256
      %34 = vsyncadd [#allocation3], %s33
      %s35 = sshll.u32 [#allocation2], 4
      %s36 = int_to_ptr.vmem [resolvable:$true] %s35
      %41 = dma.hbm_to_vmem [thread:$0]  %s0, 256, %s36, [#allocation3], 128, 128, 8
    $region5: #{tpu_custom_call.1} parent=1 // pred_fallthru
      _
    // Predicated region
    $region6: #{tpu_custom_call.1} parent=1 // pred_check
      _
    $region7: #{tpu_custom_call.1} parent=1 // pred_check_branch
      %43 = sbr.rel (0) target = $region9
    $region8: #{tpu_custom_call.1} parent=1 // pred_region
      %s45 = ssub.s32 256, 256
      %46 = vsyncadd [#allocation6], %s45
      %s47 = sshll.u32 [#allocation5], 4
      %s48 = int_to_ptr.vmem [resolvable:$true] %s47
      %53 = dma.hbm_to_vmem [thread:$0]  %s1, 256, %s48, [#allocation6], 128, 128, 8
    $region9: #{tpu_custom_call.1} parent=1 // pred_fallthru
      _
    // Predicated region
    $region10: #{tpu_custom_call.1} parent=1 // pred_check
      _
    $region11: #{tpu_custom_call.1} parent=1 // pred_check_branch
      %55 = sbr.rel (0) target = $region13
    $region12: #{tpu_custom_call.1} parent=1 // pred_region
      %s57 = ssub.s32 16, 16
      %58 = vsyncadd [#allocation6], %s57
      %s60 = sshll.u32 [#allocation7], 4
      %s61 = int_to_ptr.vmem [resolvable:$true] %s60
      %63 = dma.hbm_to_vmem [thread:$0]  %s2, 16, %s61, [#allocation6]
    $region13: #{tpu_custom_call.1} parent=1 // pred_fallthru
      _
    // Predicated region
    $region14: #{tpu_custom_call.1} parent=1 // pred_check
      _
    $region15: #{tpu_custom_call.1} parent=1 // pred_check_branch
      %65 = sbr.rel (0) target = $region17
    $region16: #{tpu_custom_call.1} parent=1 // pred_region
      %s67 = ssub.s32 16, 16
      %68 = vsyncadd [#allocation9], %s67
      %s70 = sshll.u32 [#allocation8], 4
      %s71 = int_to_ptr.vmem [resolvable:$true] %s70
      %73 = dma.hbm_to_vmem [thread:$0]  %s3, 16, %s71, [#allocation9]
    $region17: #{tpu_custom_call.1} parent=1 // pred_fallthru
      _
    // Predicated region
    $region18: #{tpu_custom_call.1} parent=1 // pred_check
      _
    $region19: #{tpu_custom_call.1} parent=1 // pred_check_branch
      %75 = sbr.rel (0) target = $region21
    $region20: #{tpu_custom_call.1} parent=1 // pred_region
      %s77 = ssub.s32 16, 16
      %78 = vsyncadd [#allocation9], %s77
      %s80 = sshll.u32 [#allocation10], 4
      %s81 = int_to_ptr.vmem [resolvable:$true] %s80
      %83 = dma.hbm_to_vmem [thread:$0]  %s4, 16, %s81, [#allocation9]
    $region21: #{tpu_custom_call.1} parent=1 // pred_fallthru
      _
    // Predicated region
    $region22: #{tpu_custom_call.1} parent=1 // pred_check
      _
    $region23: #{tpu_custom_call.1} parent=1 // pred_check_branch
      %85 = sbr.rel (0) target = $region25
    $region24: #{tpu_custom_call.1} parent=1 // pred_region
      %s87 = ssub.s32 4096, 4096
      %88 = vsyncadd [#allocation12], %s87
      %s89 = sshll.u32 [#allocation11], 4
      %s90 = int_to_ptr.vmem [resolvable:$true] %s89
      %95 = dma.hbm_to_vmem [thread:$0]  %s5, 4096, %s90, [#allocation12], 256, 256, 16
    $region25: #{tpu_custom_call.1} parent=1 // pred_fallthru
      _
    // Predicated region
    $region26: #{tpu_custom_call.1} parent=1 // pred_check
      _
    $region27: #{tpu_custom_call.1} parent=1 // pred_check_branch
      %97 = sbr.rel (0) target = $region29
    $region28: #{tpu_custom_call.1} parent=1 // pred_region
      _
    $region29: #{tpu_custom_call.1} parent=1 // pred_fallthru
      _
    // Predicated region
    $region30: #{tpu_custom_call.1} parent=1 // pred_check
      _
    $region31: #{tpu_custom_call.1} parent=1 // pred_check_branch
      %99 = sbr.rel (0) target = $region33
    $region32: #{tpu_custom_call.1} parent=1 // pred_region
      _
    $region33: #{tpu_custom_call.1} parent=1 // pred_fallthru
      _
    // Predicated region
    $region34: #{tpu_custom_call.1} parent=1 // pred_check
      _
    $region35: #{tpu_custom_call.1} parent=1 // pred_check_branch
      %101 = sbr.rel (0) target = $region37
    $region36: #{tpu_custom_call.1} parent=1 // pred_region
      _
    $region37: #{tpu_custom_call.1} parent=1 // pred_fallthru
      _
    // Predicated region
    $region38: #{tpu_custom_call.1} parent=1 // pred_check
      _
    $region39: #{tpu_custom_call.1} parent=1 // pred_check_branch
      %103 = sbr.rel (0) target = $region41
    $region40: #{tpu_custom_call.1} parent=1 // pred_region
      %s105 = ssub.s32 8192, 8192
      %106 = vsyncadd [#allocation12], %s105
      %s107 = sshll.u32 [#allocation13], 4
      %s108 = int_to_ptr.vmem [resolvable:$true] %s107
      %113 = dma.hbm_to_vmem [thread:$0]  %s9, 8192, %s108, [#allocation12], 256, 256, 16
    $region41: #{tpu_custom_call.1} parent=1 // pred_fallthru
      _
    // Predicated region
    $region42: #{tpu_custom_call.1} parent=1 // pred_check
      _
    $region43: #{tpu_custom_call.1} parent=1 // pred_check_branch
      %115 = sbr.rel (0) target = $region45
    $region44: #{tpu_custom_call.1} parent=1 // pred_region
      _
    $region45: #{tpu_custom_call.1} parent=1 // pred_fallthru
      _
    // Predicated region
    $region46: #{tpu_custom_call.1} parent=1 // pred_check
      _
    $region47: #{tpu_custom_call.1} parent=1 // pred_check_branch
      %117 = sbr.rel (0) target = $region49
    $region48: #{tpu_custom_call.1} parent=1 // pred_region
      _
    $region49: #{tpu_custom_call.1} parent=1 // pred_fallthru
      _
    // Predicated region
    $region50: #{tpu_custom_call.1} parent=1 // pred_check
      _
    $region51: #{tpu_custom_call.1} parent=1 // pred_check_branch
      %119 = sbr.rel (0) target = $region53
    $region52: #{tpu_custom_call.1} parent=1 // pred_region
      _
    $region53: #{tpu_custom_call.1} parent=1 // pred_fallthru
      _
    // Predicated region
    $region54: #{tpu_custom_call.1} parent=1 // pred_check
      _
    $region55: #{tpu_custom_call.1} parent=1 // pred_check_branch
      %121 = sbr.rel (0) target = $region57
    $region56: #{tpu_custom_call.1} parent=1 // pred_region
      %s123 = ssub.s32 4096, 4096
      %124 = vsyncadd [#allocation15], %s123
      %s125 = sshll.u32 [#allocation14], 4
      %s126 = int_to_ptr.vmem [resolvable:$true] %s125
      %131 = dma.hbm_to_vmem [thread:$0]  %s13, 4096, %s126, [#allocation15], 128, 128, 8
    $region57: #{tpu_custom_call.1} parent=1 // pred_fallthru
      _
    // Predicated region
    $region58: #{tpu_custom_call.1} parent=1 // pred_check
      _
    $region59: #{tpu_custom_call.1} parent=1 // pred_check_branch
      %133 = sbr.rel (0) target = $region61
    $region60: #{tpu_custom_call.1} parent=1 // pred_region
      _
    $region61: #{tpu_custom_call.1} parent=1 // pred_fallthru
      _
    // Predicated region
    $region62: #{tpu_custom_call.1} parent=1 // pred_check
      _
    $region63: #{tpu_custom_call.1} parent=1 // pred_check_branch
      %135 = sbr.rel (0) target = $region65
    $region64: #{tpu_custom_call.1} parent=1 // pred_region
      _
    $region65: #{tpu_custom_call.1} parent=1 // pred_fallthru
      _
    // Predicated region
    $region66: #{tpu_custom_call.1} parent=1 // pred_check
      _
    $region67: #{tpu_custom_call.1} parent=1 // pred_check_branch
      %137 = sbr.rel (0) target = $region69
    $region68: #{tpu_custom_call.1} parent=1 // pred_region
      _
    $region69: #{tpu_custom_call.1} parent=1 // pred_fallthru
      _
    // Predicated region
    $region70: #{tpu_custom_call.1} parent=1 // pred_check
      _
    $region71: #{tpu_custom_call.1} parent=1 // pred_check_branch
      %139 = sbr.rel (0) target = $region73
    $region72: #{tpu_custom_call.1} parent=1 // pred_region
      %s141 = ssub.s32 2048, 2048
      %142 = vsyncadd [#allocation15], %s141
      %s143 = sshll.u32 [#allocation16], 4
      %s144 = int_to_ptr.vmem [resolvable:$true] %s143
      %149 = dma.hbm_to_vmem [thread:$0]  %s17, 2048, %s144, [#allocation15], 128, 128, 8
    $region73: #{tpu_custom_call.1} parent=1 // pred_fallthru
      _
    // Predicated region
    $region74: #{tpu_custom_call.1} parent=1 // pred_check
      _
    $region75: #{tpu_custom_call.1} parent=1 // pred_check_branch
      %151 = sbr.rel (0) target = $region77
    $region76: #{tpu_custom_call.1} parent=1 // pred_region
      _
    $region77: #{tpu_custom_call.1} parent=1 // pred_fallthru
      _
    // Predicated region
    $region78: #{tpu_custom_call.1} parent=1 // pred_check
      _
    $region79: #{tpu_custom_call.1} parent=1 // pred_check_branch
      %153 = sbr.rel (0) target = $region81
    $region80: #{tpu_custom_call.1} parent=1 // pred_region
      %154 = dma.done [#allocation3], 256
    $region81: #{tpu_custom_call.1} parent=1 // pred_fallthru
      _
    // Predicated region
    $region82: #{tpu_custom_call.1} parent=1 // pred_check
      _
    $region83: #{tpu_custom_call.1} parent=1 // pred_check_branch
      %156 = sbr.rel (0) target = $region85
    $region84: #{tpu_custom_call.1} parent=1 // pred_region
      %157 = dma.done [#allocation6], 256
    $region85: #{tpu_custom_call.1} parent=1 // pred_fallthru
      _
    // Predicated region
    $region86: #{tpu_custom_call.1} parent=1 // pred_check
      _
    $region87: #{tpu_custom_call.1} parent=1 // pred_check_branch
      %159 = sbr.rel (0) target = $region89
    $region88: #{tpu_custom_call.1} parent=1 // pred_region
      %160 = dma.done [#allocation6], 16
    $region89: #{tpu_custom_call.1} parent=1 // pred_fallthru
      _
    // Predicated region
    $region90: #{tpu_custom_call.1} parent=1 // pred_check
      _
    $region91: #{tpu_custom_call.1} parent=1 // pred_check_branch
      %162 = sbr.rel (0) target = $region93
    $region92: #{tpu_custom_call.1} parent=1 // pred_region
      %163 = dma.done [#allocation9], 16
    $region93: #{tpu_custom_call.1} parent=1 // pred_fallthru
      _
    // Predicated region
    $region94: #{tpu_custom_call.1} parent=1 // pred_check
      _
    $region95: #{tpu_custom_call.1} parent=1 // pred_check_branch
      %165 = sbr.rel (0) target = $region97
    $region96: #{tpu_custom_call.1} parent=1 // pred_region
      %166 = dma.done [#allocation9], 16
    $region97: #{tpu_custom_call.1} parent=1 // pred_fallthru
      _
    // Predicated region
    $region98: #{tpu_custom_call.1} parent=1 // pred_check
      _
    $region99: #{tpu_custom_call.1} parent=1 // pred_check_branch
      %168 = sbr.rel (0) target = $region101
    $region100: #{tpu_custom_call.1} parent=1 // pred_region
      %169 = dma.done [#allocation12], 4096
    $region101: #{tpu_custom_call.1} parent=1 // pred_fallthru
      _
    // Predicated region
    $region102: #{tpu_custom_call.1} parent=1 // pred_check
      _
    $region103: #{tpu_custom_call.1} parent=1 // pred_check_branch
      %171 = sbr.rel (0) target = $region105
    $region104: #{tpu_custom_call.1} parent=1 // pred_region
      %172 = dma.done [#allocation12], 8192
    $region105: #{tpu_custom_call.1} parent=1 // pred_fallthru
      _
    // Predicated region
    $region106: #{tpu_custom_call.1} parent=1 // pred_check
      _
    $region107: #{tpu_custom_call.1} parent=1 // pred_check_branch
      %174 = sbr.rel (0) target = $region109
    $region108: #{tpu_custom_call.1} parent=1 // pred_region
      %175 = dma.done [#allocation15], 4096
    $region109: #{tpu_custom_call.1} parent=1 // pred_fallthru
      _
    // Predicated region
    $region110: #{tpu_custom_call.1} parent=1 // pred_check
      _
    $region111: #{tpu_custom_call.1} parent=1 // pred_check_branch
      %177 = sbr.rel (0) target = $region113
    $region112: #{tpu_custom_call.1} parent=1 // pred_region
      %178 = dma.done [#allocation15], 2048
    $region113: #{tpu_custom_call.1} parent=1 // pred_fallthru
      _
    %v179 = vld [vmem:[#allocation5] sm:$0xff]
    %v180 = vld [vmem:[#allocation5 + $0x8] sm:$0xff]
    %v181 = vld [vmem:[#allocation7] sm:$0x1]
    %v182 = vld [vmem:[#allocation8] sm:$0x1]
    %v183 = vld [vmem:[#allocation10] sm:$0x1]
    %v184 = vld [vmem:[#allocation11] sm:$0xff]
    %v185 = vld [vmem:[#allocation11 + $0x8] sm:$0xff]
    %v186 = vld [vmem:[#allocation11 + $0x10] sm:$0xff]
    %v187 = vld [vmem:[#allocation11 + $0x18] sm:$0xff]
    %v188 = vld [vmem:[#allocation11 + $0x20] sm:$0xff]
    %v189 = vld [vmem:[#allocation11 + $0x28] sm:$0xff]
    %v190 = vld [vmem:[#allocation11 + $0x30] sm:$0xff]
    %v191 = vld [vmem:[#allocation11 + $0x38] sm:$0xff]
    %v192 = vld [vmem:[#allocation11 + $0x40] sm:$0xff]
    %v193 = vld [vmem:[#allocation11 + $0x48] sm:$0xff]
    %v194 = vld [vmem:[#allocation11 + $0x50] sm:$0xff]
    %v195 = vld [vmem:[#allocation11 + $0x58] sm:$0xff]
    %v196 = vld [vmem:[#allocation11 + $0x60] sm:$0xff]
    %v197 = vld [vmem:[#allocation11 + $0x68] sm:$0xff]
    %v198 = vld [vmem:[#allocation11 + $0x70] sm:$0xff]
    %v199 = vld [vmem:[#allocation11 + $0x78] sm:$0xff]
    %v200 = vld [vmem:[#allocation11 + $0x80] sm:$0xff]
    %v201 = vld [vmem:[#allocation11 + $0x88] sm:$0xff]
    %v202 = vld [vmem:[#allocation11 + $0x90] sm:$0xff]
    %v203 = vld [vmem:[#allocation11 + $0x98] sm:$0xff]
    %v204 = vld [vmem:[#allocation11 + $0xa0] sm:$0xff]
    %v205 = vld [vmem:[#allocation11 + $0xa8] sm:$0xff]
    %v206 = vld [vmem:[#allocation11 + $0xb0] sm:$0xff]
    %v207 = vld [vmem:[#allocation11 + $0xb8] sm:$0xff]
    %v208 = vld [vmem:[#allocation11 + $0xc0] sm:$0xff]
    %v209 = vld [vmem:[#allocation11 + $0xc8] sm:$0xff]
    %v210 = vld [vmem:[#allocation11 + $0xd0] sm:$0xff]
    %v211 = vld [vmem:[#allocation11 + $0xd8] sm:$0xff]
    %v212 = vld [vmem:[#allocation11 + $0xe0] sm:$0xff]
    %v213 = vld [vmem:[#allocation11 + $0xe8] sm:$0xff]
    %v214 = vld [vmem:[#allocation11 + $0xf0] sm:$0xff]
    %v215 = vld [vmem:[#allocation11 + $0xf8] sm:$0xff]
    %v216 = vld [vmem:[%s6] sm:$0x3]
    %v217 = vld [vmem:[%s7] sm:$0x3]
    %v218 = vld [vmem:[%s8] sm:$0x3]
    %v219 = vld [vmem:[#allocation13] sm:$0xff]
    %v220 = vld [vmem:[#allocation13 + $0x8] sm:$0xff]
    %v221 = vld [vmem:[#allocation13 + $0x10] sm:$0xff]
    %v222 = vld [vmem:[#allocation13 + $0x18] sm:$0xff]
    %v223 = vld [vmem:[#allocation13 + $0x20] sm:$0xff]
    %v224 = vld [vmem:[#allocation13 + $0x28] sm:$0xff]
    %v225 = vld [vmem:[#allocation13 + $0x30] sm:$0xff]
    %v226 = vld [vmem:[#allocation13 + $0x38] sm:$0xff]
    %v227 = vld [vmem:[#allocation13 + $0x40] sm:$0xff]
    %v228 = vld [vmem:[#allocation13 + $0x48] sm:$0xff]
    %v229 = vld [vmem:[#allocation13 + $0x50] sm:$0xff]
    %v230 = vld [vmem:[#allocation13 + $0x58] sm:$0xff]
    %v231 = vld [vmem:[#allocation13 + $0x60] sm:$0xff]
    %v232 = vld [vmem:[#allocation13 + $0x68] sm:$0xff]
    %v233 = vld [vmem:[#allocation13 + $0x70] sm:$0xff]
    %v234 = vld [vmem:[#allocation13 + $0x78] sm:$0xff]
    %v235 = vld [vmem:[#allocation13 + $0x80] sm:$0xff]
    %v236 = vld [vmem:[#allocation13 + $0x88] sm:$0xff]
    %v237 = vld [vmem:[#allocation13 + $0x90] sm:$0xff]
    %v238 = vld [vmem:[#allocation13 + $0x98] sm:$0xff]
    %v239 = vld [vmem:[#allocation13 + $0xa0] sm:$0xff]
    %v240 = vld [vmem:[#allocation13 + $0xa8] sm:$0xff]
    %v241 = vld [vmem:[#allocation13 + $0xb0] sm:$0xff]
    %v242 = vld [vmem:[#allocation13 + $0xb8] sm:$0xff]
    %v243 = vld [vmem:[#allocation13 + $0xc0] sm:$0xff]
    %v244 = vld [vmem:[#allocation13 + $0xc8] sm:$0xff]
    %v245 = vld [vmem:[#allocation13 + $0xd0] sm:$0xff]
    %v246 = vld [vmem:[#allocation13 + $0xd8] sm:$0xff]
    %v247 = vld [vmem:[#allocation13 + $0xe0] sm:$0xff]
    %v248 = vld [vmem:[#allocation13 + $0xe8] sm:$0xff]
    %v249 = vld [vmem:[#allocation13 + $0xf0] sm:$0xff]
    %v250 = vld [vmem:[#allocation13 + $0xf8] sm:$0xff]
    %v251 = vld [vmem:[#allocation13 + $0x100] sm:$0xff]
    %v252 = vld [vmem:[#allocation13 + $0x108] sm:$0xff]
    %v253 = vld [vmem:[#allocation13 + $0x110] sm:$0xff]
    %v254 = vld [vmem:[#allocation13 + $0x118] sm:$0xff]
    %v255 = vld [vmem:[#allocation13 + $0x120] sm:$0xff]
    %v256 = vld [vmem:[#allocation13 + $0x128] sm:$0xff]
    %v257 = vld [vmem:[#allocation13 + $0x130] sm:$0xff]
    %v258 = vld [vmem:[#allocation13 + $0x138] sm:$0xff]
    %v259 = vld [vmem:[#allocation13 + $0x140] sm:$0xff]
    %v260 = vld [vmem:[#allocation13 + $0x148] sm:$0xff]
    %v261 = vld [vmem:[#allocation13 + $0x150] sm:$0xff]
    %v262 = vld [vmem:[#allocation13 + $0x158] sm:$0xff]
    %v263 = vld [vmem:[#allocation13 + $0x160] sm:$0xff]
    %v264 = vld [vmem:[#allocation13 + $0x168] sm:$0xff]
    %v265 = vld [vmem:[#allocation13 + $0x170] sm:$0xff]
    %v266 = vld [vmem:[#allocation13 + $0x178] sm:$0xff]
    %v267 = vld [vmem:[#allocation13 + $0x180] sm:$0xff]
    %v268 = vld [vmem:[#allocation13 + $0x188] sm:$0xff]
    %v269 = vld [vmem:[#allocation13 + $0x190] sm:$0xff]
    %v270 = vld [vmem:[#allocation13 + $0x198] sm:$0xff]
    %v271 = vld [vmem:[#allocation13 + $0x1a0] sm:$0xff]
    %v272 = vld [vmem:[#allocation13 + $0x1a8] sm:$0xff]
    %v273 = vld [vmem:[#allocation13 + $0x1b0] sm:$0xff]
    %v274 = vld [vmem:[#allocation13 + $0x1b8] sm:$0xff]
    %v275 = vld [vmem:[#allocation13 + $0x1c0] sm:$0xff]
    %v276 = vld [vmem:[#allocation13 + $0x1c8] sm:$0xff]
    %v277 = vld [vmem:[#allocation13 + $0x1d0] sm:$0xff]
    %v278 = vld [vmem:[#allocation13 + $0x1d8] sm:$0xff]
    %v279 = vld [vmem:[#allocation13 + $0x1e0] sm:$0xff]
    %v280 = vld [vmem:[#allocation13 + $0x1e8] sm:$0xff]
    %v281 = vld [vmem:[#allocation13 + $0x1f0] sm:$0xff]
    %v282 = vld [vmem:[#allocation13 + $0x1f8] sm:$0xff]
    %v283 = vld [vmem:[%s10] sm:$0x3]
    %v284 = vld [vmem:[%s11] sm:$0x3]
    %v285 = vld [vmem:[%s12] sm:$0x3]
    %v286 = vld [vmem:[#allocation14] sm:$0xff]
    %v287 = vld [vmem:[#allocation14 + $0x8] sm:$0xff]
    %v288 = vld [vmem:[#allocation14 + $0x10] sm:$0xff]
    %v289 = vld [vmem:[#allocation14 + $0x18] sm:$0xff]
    %v290 = vld [vmem:[#allocation14 + $0x20] sm:$0xff]
    %v291 = vld [vmem:[#allocation14 + $0x28] sm:$0xff]
    %v292 = vld [vmem:[#allocation14 + $0x30] sm:$0xff]
    %v293 = vld [vmem:[#allocation14 + $0x38] sm:$0xff]
    %v294 = vld [vmem:[#allocation14 + $0x40] sm:$0xff]
    %v295 = vld [vmem:[#allocation14 + $0x48] sm:$0xff]
    %v296 = vld [vmem:[#allocation14 + $0x50] sm:$0xff]
    %v297 = vld [vmem:[#allocation14 + $0x58] sm:$0xff]
    %v298 = vld [vmem:[#allocation14 + $0x60] sm:$0xff]
    %v299 = vld [vmem:[#allocation14 + $0x68] sm:$0xff]
    %v300 = vld [vmem:[#allocation14 + $0x70] sm:$0xff]
    %v301 = vld [vmem:[#allocation14 + $0x78] sm:$0xff]
    %v302 = vld [vmem:[#allocation14 + $0x80] sm:$0xff]
    %v303 = vld [vmem:[#allocation14 + $0x88] sm:$0xff]
    %v304 = vld [vmem:[#allocation14 + $0x90] sm:$0xff]
    %v305 = vld [vmem:[#allocation14 + $0x98] sm:$0xff]
    %v306 = vld [vmem:[#allocation14 + $0xa0] sm:$0xff]
    %v307 = vld [vmem:[#allocation14 + $0xa8] sm:$0xff]
    %v308 = vld [vmem:[#allocation14 + $0xb0] sm:$0xff]
    %v309 = vld [vmem:[#allocation14 + $0xb8] sm:$0xff]
    %v310 = vld [vmem:[#allocation14 + $0xc0] sm:$0xff]
    %v311 = vld [vmem:[#allocation14 + $0xc8] sm:$0xff]
    %v312 = vld [vmem:[#allocation14 + $0xd0] sm:$0xff]
    %v313 = vld [vmem:[#allocation14 + $0xd8] sm:$0xff]
    %v314 = vld [vmem:[#allocation14 + $0xe0] sm:$0xff]
    %v315 = vld [vmem:[#allocation14 + $0xe8] sm:$0xff]
    %v316 = vld [vmem:[#allocation14 + $0xf0] sm:$0xff]
    %v317 = vld [vmem:[#allocation14 + $0xf8] sm:$0xff]
    %v318 = vld [vmem:[%s14] sm:$0x1]
    %v319 = vld [vmem:[%s15] sm:$0x1]
    %v320 = vld [vmem:[%s16] sm:$0x1]
    %v321 = vld [vmem:[#allocation16] sm:$0xff]
    %v322 = vld [vmem:[#allocation16 + $0x8] sm:$0xff]
    %v323 = vld [vmem:[#allocation16 + $0x10] sm:$0xff]
    %v324 = vld [vmem:[#allocation16 + $0x18] sm:$0xff]
    %v325 = vld [vmem:[#allocation16 + $0x20] sm:$0xff]
    %v326 = vld [vmem:[#allocation16 + $0x28] sm:$0xff]
    %v327 = vld [vmem:[#allocation16 + $0x30] sm:$0xff]
    %v328 = vld [vmem:[#allocation16 + $0x38] sm:$0xff]
    %v329 = vld [vmem:[#allocation16 + $0x40] sm:$0xff]
    %v330 = vld [vmem:[#allocation16 + $0x48] sm:$0xff]
    %v331 = vld [vmem:[#allocation16 + $0x50] sm:$0xff]
    %v332 = vld [vmem:[#allocation16 + $0x58] sm:$0xff]
    %v333 = vld [vmem:[#allocation16 + $0x60] sm:$0xff]
    %v334 = vld [vmem:[#allocation16 + $0x68] sm:$0xff]
    %v335 = vld [vmem:[#allocation16 + $0x70] sm:$0xff]
    %v336 = vld [vmem:[#allocation16 + $0x78] sm:$0xff]
    %v337 = vld [vmem:[%s18] sm:$0x1]
    %v338 = vld [vmem:[#allocation2] sm:$0xff]
    %v339 = vld [vmem:[#allocation2 + $0x8] sm:$0xff]
    %v341 = vlaneseq
    %v342 = vshrl.u32 %v341, 7
    %v343 = vsub.s32 0, %v342
    %v344 = vrot.slane %v181, %v343
    %vm346 = vcmask 130048
    %v348 = vsel %vm346, %v338, 0
    %v351 = vsel %vm346, %v339, 0
    %353 = vmatprep.subr.mxu0 0.0
    %354 = vmatpush1.msra.mxu0 0.0
    %355 = vmatprep.subr.mxu0 0.0
    %356 = vmatpush1.msra.mxu0 0.0
    %357 = vmatprep.subr.mxu0 0.0
    %358 = vmatpush1.msra.mxu0 0.0
    %359 = vmatprep.subr.mxu0 0.0
    %360 = vmatpush1.msra.mxu0 0.0
    %361 = vmatprep.subr.mxu0 0.0
    %362 = vmatpush1.msra.mxu0 0.0
    %363 = vmatprep.subr.mxu0 0.0
    %364 = vmatpush1.msra.mxu0 0.0
    %365 = vmatprep.subr.mxu0 0.0
    %366 = vmatpush1.msra.mxu0 0.0
    %367 = vmatprep.subr.mxu0 0.0
    %368 = vmatpush1.msra.mxu0 0.0
    %369 = vmatprep.subr.mxu0 0.0
    %370 = vmatpush1.msra.mxu0 0.0
    %371 = vmatprep.subr.mxu0 0.0
    %372 = vmatpush1.msra.mxu0 0.0
    %373 = vmatprep.subr.mxu0 0.0
    %374 = vmatpush1.msra.mxu0 0.0
    %375 = vmatprep.subr.mxu0 0.0
    %376 = vmatpush1.msra.mxu0 0.0
    %377 = vmatprep.subr.mxu0 0.0
    %378 = vmatpush1.msra.mxu0 0.0
    %379 = vmatprep.subr.mxu0 0.0
    %380 = vmatpush1.msra.mxu0 0.0
    %381 = vmatprep.subr.mxu0 0.0
    %382 = vmatpush1.msra.mxu0 %v180
    %383 = vmatprep.subr.mxu0 0.0
    %384 = vmatpush1.msra.mxu0 %v179
    %385 = vmatprep.subr.mxu0 0.0
    %386 = vmatpush2.msra.mxu0 0.0
    %387 = vmatprep.subr.mxu0 0.0
    %388 = vmatpush2.msra.mxu0 0.0
    %389 = vmatprep.subr.mxu0 0.0
    %390 = vmatpush2.msra.mxu0 0.0
    %391 = vmatprep.subr.mxu0 0.0
    %392 = vmatpush2.msra.mxu0 0.0
    %393 = vmatprep.subr.mxu0 0.0
    %394 = vmatpush2.msra.mxu0 0.0
    %395 = vmatprep.subr.mxu0 0.0
    %396 = vmatpush2.msra.mxu0 0.0
    %397 = vmatprep.subr.mxu0 0.0
    %398 = vmatpush2.msra.mxu0 0.0
    %399 = vmatprep.subr.mxu0 0.0
    %400 = vmatpush2.msra.mxu0 0.0
    %401 = vmatprep.subr.mxu0 0.0
    %402 = vmatpush2.msra.mxu0 0.0
    %403 = vmatprep.subr.mxu0 0.0
    %404 = vmatpush2.msra.mxu0 0.0
    %405 = vmatprep.subr.mxu0 0.0
    %406 = vmatpush2.msra.mxu0 0.0
    %407 = vmatprep.subr.mxu0 0.0
    %408 = vmatpush2.msra.mxu0 0.0
    %409 = vmatprep.subr.mxu0 0.0
    %410 = vmatpush2.msra.mxu0 0.0
    %411 = vmatprep.subr.mxu0 0.0
    %412 = vmatpush2.msra.mxu0 0.0
    %413 = vmatprep.subr.mxu0 0.0
    %414 = vmatpush2.msra.mxu0 0.0
    %415 = vmatprep.subr.mxu0 0.0
    %416 = vmatpush2.msra.mxu0 0.0
    %417 = vmatprep.mubr.f32.mxu0 0.0
    %418 = vmatmul.mubr.f32.gmra.mxu0 %v348
    %v419 = vpop.f32.mrf.mxu0
    %v420 = vadd.f32 %v344, %v419
    %v421 = vpop.f32.mrf.mxu0
    %422 = vmatprep.mubr.f32.mxu0 0.0
    %423 = vmatmul.mubr.f32.gmra.mxu0 %v351
    %v424 = vpop.f32.mrf.mxu0
    %v425 = vadd.f32 %v344, %v424
    %v426 = vpop.f32.mrf.mxu0
    %427 = vdwg.mxu0
    %vm428 = vcmp.gt.f32.partialorder %v420, 0.0
    %vm429 = vcmp.gt.f32.partialorder %v425, 0.0
    %v430 = vmul.f32 %v420, 0.01
    %v431 = vmul.f32 %v425, 0.01
    %v432 = vsel %vm428, %v420, %v430
    %v433 = vsel %vm429, %v425, %v431
    %434 = vadd.xlane.f32.xlu0 %v432
    %v435 = vpop.xlane.xlu0 %434
    %436 = vadd.xlane.f32.xlu0 %v433
    %v437 = vpop.xlane.xlu0 %436
    %v438 = vmul.f32 %v432, %v432
    %v439 = vmul.f32 %v433, %v433
    %440 = vadd.xlane.f32.xlu0 %v438
    %v441 = vpop.xlane.xlu0 %440
    %442 = vadd.xlane.f32.xlu0 %v439
    %v443 = vpop.xlane.xlu0 %442
    %v444 = vmul.f32 %v435, 0.0078125
    %v445 = vmul.f32 %v437, 0.0078125
    %v446 = vmul.f32 %v441, 0.0078125
    %v447 = vmul.f32 %v443, 0.0078125
    %v448 = vmul.f32 %v444, %v444
    %v449 = vmul.f32 %v445, %v445
    %v450 = vsub.f32 %v446, %v448
    %v451 = vsub.f32 %v447, %v449
    %v452 = vmax.f32 %v450, 0.0
    %v453 = vmax.f32 %v451, 0.0
    %v454 = vadd.f32 %v452, 1e-05
    %v455 = vadd.f32 %v453, 1e-05
    %v456 = vrsqrt.pop %v454
    %v457 = vrsqrt.pop %v455
    %v458 = vsub.f32 %v432, %v444
    %v459 = vsub.f32 %v433, %v445
    %v461 = vlaneseq
    %v462 = vshrl.u32 %v461, 7
    %v463 = vsub.s32 0, %v462
    %v464 = vrot.slane %v182, %v463
    %v466 = vmul.f32 %v464, %v456
    %v467 = vmul.f32 %v464, %v457
    %v468 = vmul.f32 %v458, %v466
    %v469 = vmul.f32 %v459, %v467
    %v471 = vlaneseq
    %v472 = vshrl.u32 %v471, 7
    %v473 = vsub.s32 0, %v472
    %v474 = vrot.slane %v183, %v473
    %v476 = vadd.f32 %v468, %v474
    %v477 = vadd.f32 %v469, %v474
    %v479 = vlaneseq
    %v480 = vshrl.u32 %v479, 7
    %v481 = vsub.s32 0, %v480
    %v482 = vrot.slane %v216, %v481
    %v483 = vlaneseq
    %v484 = vshrl.u32 %v483, 7
    %v485 = vsub.s32 1, %v484
    %v486 = vrot.slane %v216, %v485
    %489 = vmatprep.subr.mxu0 %v215
    %490 = vmatpush1.msra.mxu0 %v214
    %491 = vmatprep.subr.mxu0 %v213
    %492 = vmatpush1.msra.mxu0 %v212
    %493 = vmatprep.subr.mxu0 %v211
    %494 = vmatpush1.msra.mxu0 %v210
    %495 = vmatprep.subr.mxu0 %v209
    %496 = vmatpush1.msra.mxu0 %v208
    %497 = vmatprep.subr.mxu0 %v207
    %498 = vmatpush1.msra.mxu0 %v206
    %499 = vmatprep.subr.mxu0 %v205
    %500 = vmatpush1.msra.mxu0 %v204
    %501 = vmatprep.subr.mxu0 %v203
    %502 = vmatpush1.msra.mxu0 %v202
    %503 = vmatprep.subr.mxu0 %v201
    %504 = vmatpush1.msra.mxu0 %v200
    %505 = vmatprep.subr.mxu0 %v199
    %506 = vmatpush1.msra.mxu0 %v198
    %507 = vmatprep.subr.mxu0 %v197
    %508 = vmatpush1.msra.mxu0 %v196
    %509 = vmatprep.subr.mxu0 %v195
    %510 = vmatpush1.msra.mxu0 %v194
    %511 = vmatprep.subr.mxu0 %v193
    %512 = vmatpush1.msra.mxu0 %v192
    %513 = vmatprep.subr.mxu0 %v191
    %514 = vmatpush1.msra.mxu0 %v190
    %515 = vmatprep.subr.mxu0 %v189
    %516 = vmatpush1.msra.mxu0 %v188
    %517 = vmatprep.subr.mxu0 %v187
    %518 = vmatpush1.msra.mxu0 %v186
    %519 = vmatprep.subr.mxu0 %v185
    %520 = vmatpush1.msra.mxu0 %v184
    %521 = vmatprep.subr.mxu0 0.0
    %522 = vmatpush2.msra.mxu0 0.0
    %523 = vmatprep.subr.mxu0 0.0
    %524 = vmatpush2.msra.mxu0 0.0
    %525 = vmatprep.subr.mxu0 0.0
    %526 = vmatpush2.msra.mxu0 0.0
    %527 = vmatprep.subr.mxu0 0.0
    %528 = vmatpush2.msra.mxu0 0.0
    %529 = vmatprep.subr.mxu0 0.0
    %530 = vmatpush2.msra.mxu0 0.0
    %531 = vmatprep.subr.mxu0 0.0
    %532 = vmatpush2.msra.mxu0 0.0
    %533 = vmatprep.subr.mxu0 0.0
    %534 = vmatpush2.msra.mxu0 0.0
    %535 = vmatprep.subr.mxu0 0.0
    %536 = vmatpush2.msra.mxu0 0.0
    %537 = vmatprep.subr.mxu0 0.0
    %538 = vmatpush2.msra.mxu0 0.0
    %539 = vmatprep.subr.mxu0 0.0
    %540 = vmatpush2.msra.mxu0 0.0
    %541 = vmatprep.subr.mxu0 0.0
    %542 = vmatpush2.msra.mxu0 0.0
    %543 = vmatprep.subr.mxu0 0.0
    %544 = vmatpush2.msra.mxu0 0.0
    %545 = vmatprep.subr.mxu0 0.0
    %546 = vmatpush2.msra.mxu0 0.0
    %547 = vmatprep.subr.mxu0 0.0
    %548 = vmatpush2.msra.mxu0 0.0
    %549 = vmatprep.subr.mxu0 0.0
    %550 = vmatpush2.msra.mxu0 0.0
    %551 = vmatprep.subr.mxu0 0.0
    %552 = vmatpush2.msra.mxu0 0.0
    %553 = vmatprep.mubr.f32.mxu0 0.0
    %554 = vmatmul.mubr.f32.gmra.mxu0 %v476
    %v555 = vpop.f32.mrf.mxu0
    %v556 = vadd.f32 %v482, %v555
    %v557 = vpop.f32.mrf.mxu0
    %v558 = vadd.f32 %v486, %v557
    %559 = vmatprep.mubr.f32.mxu0 0.0
    %560 = vmatmul.mubr.f32.gmra.mxu0 %v477
    %v561 = vpop.f32.mrf.mxu0
    %v562 = vadd.f32 %v482, %v561
    %v563 = vpop.f32.mrf.mxu0
    %v564 = vadd.f32 %v486, %v563
    %565 = vdwg.mxu0
    %vm566 = vcmp.gt.f32.partialorder %v556, 0.0
    %vm567 = vcmp.gt.f32.partialorder %v558, 0.0
    %vm568 = vcmp.gt.f32.partialorder %v562, 0.0
    %vm569 = vcmp.gt.f32.partialorder %v564, 0.0
    %v570 = vmul.f32 %v556, 0.01
    %v571 = vmul.f32 %v558, 0.01
    %v572 = vmul.f32 %v562, 0.01
    %v573 = vmul.f32 %v564, 0.01
    %v574 = vsel %vm566, %v556, %v570
    %v575 = vsel %vm567, %v558, %v571
    %v576 = vsel %vm568, %v562, %v572
    %v577 = vsel %vm569, %v564, %v573
    %v578 = vadd.f32 %v574, %v575
    %579 = vadd.xlane.f32.xlu0 %v578
    %v580 = vpop.xlane.xlu0 %579
    %v581 = vadd.f32 %v576, %v577
    %582 = vadd.xlane.f32.xlu0 %v581
    %v583 = vpop.xlane.xlu0 %582
    %v584 = vmul.f32 %v574, %v574
    %v585 = vmul.f32 %v575, %v575
    %v586 = vmul.f32 %v576, %v576
    %v587 = vmul.f32 %v577, %v577
    %v588 = vadd.f32 %v584, %v585
    %589 = vadd.xlane.f32.xlu0 %v588
    %v590 = vpop.xlane.xlu0 %589
    %v591 = vadd.f32 %v586, %v587
    %592 = vadd.xlane.f32.xlu0 %v591
    %v593 = vpop.xlane.xlu0 %592
    %v594 = vmul.f32 %v580, 0.00390625
    %v595 = vmul.f32 %v583, 0.00390625
    %v596 = vmul.f32 %v590, 0.00390625
    %v597 = vmul.f32 %v593, 0.00390625
    %v598 = vmul.f32 %v594, %v594
    %v599 = vmul.f32 %v595, %v595
    %v600 = vsub.f32 %v596, %v598
    %v601 = vsub.f32 %v597, %v599
    %v602 = vmax.f32 %v600, 0.0
    %v603 = vmax.f32 %v601, 0.0
    %v604 = vadd.f32 %v602, 1e-05
    %v605 = vadd.f32 %v603, 1e-05
    %v606 = vrsqrt.pop %v604
    %v607 = vrsqrt.pop %v605
    %v608 = vsub.f32 %v574, %v594
    %v609 = vsub.f32 %v575, %v594
    %v610 = vsub.f32 %v576, %v595
    %v611 = vsub.f32 %v577, %v595
    %v613 = vlaneseq
    %v614 = vshrl.u32 %v613, 7
    %v615 = vsub.s32 0, %v614
    %v616 = vrot.slane %v217, %v615
    %v617 = vlaneseq
    %v618 = vshrl.u32 %v617, 7
    %v619 = vsub.s32 1, %v618
    %v620 = vrot.slane %v217, %v619
    %v623 = vmul.f32 %v616, %v606
    %v624 = vmul.f32 %v620, %v606
    %v625 = vmul.f32 %v616, %v607
    %v626 = vmul.f32 %v620, %v607
    %v627 = vmul.f32 %v608, %v623
    %v628 = vmul.f32 %v609, %v624
    %v629 = vmul.f32 %v610, %v625
    %v630 = vmul.f32 %v611, %v626
    %v632 = vlaneseq
    %v633 = vshrl.u32 %v632, 7
    %v634 = vsub.s32 0, %v633
    %v635 = vrot.slane %v218, %v634
    %v636 = vlaneseq
    %v637 = vshrl.u32 %v636, 7
    %v638 = vsub.s32 1, %v637
    %v639 = vrot.slane %v218, %v638
    %v642 = vadd.f32 %v627, %v635
    %v643 = vadd.f32 %v628, %v639
    %v644 = vadd.f32 %v629, %v635
    %v645 = vadd.f32 %v630, %v639
    %v647 = vlaneseq
    %v648 = vshrl.u32 %v647, 7
    %v649 = vsub.s32 0, %v648
    %v650 = vrot.slane %v283, %v649
    %v651 = vlaneseq
    %v652 = vshrl.u32 %v651, 7
    %v653 = vsub.s32 1, %v652
    %v654 = vrot.slane %v283, %v653
    %657 = vmatprep.subr.mxu0 %v250
    %658 = vmatpush1.msra.mxu0 %v249
    %659 = vmatprep.subr.mxu0 %v248
    %660 = vmatpush1.msra.mxu0 %v247
    %661 = vmatprep.subr.mxu0 %v246
    %662 = vmatpush1.msra.mxu0 %v245
    %663 = vmatprep.subr.mxu0 %v244
    %664 = vmatpush1.msra.mxu0 %v243
    %665 = vmatprep.subr.mxu0 %v242
    %666 = vmatpush1.msra.mxu0 %v241
    %667 = vmatprep.subr.mxu0 %v240
    %668 = vmatpush1.msra.mxu0 %v239
    %669 = vmatprep.subr.mxu0 %v238
    %670 = vmatpush1.msra.mxu0 %v237
    %671 = vmatprep.subr.mxu0 %v236
    %672 = vmatpush1.msra.mxu0 %v235
    %673 = vmatprep.subr.mxu0 %v234
    %674 = vmatpush1.msra.mxu0 %v233
    %675 = vmatprep.subr.mxu0 %v232
    %676 = vmatpush1.msra.mxu0 %v231
    %677 = vmatprep.subr.mxu0 %v230
    %678 = vmatpush1.msra.mxu0 %v229
    %679 = vmatprep.subr.mxu0 %v228
    %680 = vmatpush1.msra.mxu0 %v227
    %681 = vmatprep.subr.mxu0 %v226
    %682 = vmatpush1.msra.mxu0 %v225
    %683 = vmatprep.subr.mxu0 %v224
    %684 = vmatpush1.msra.mxu0 %v223
    %685 = vmatprep.subr.mxu0 %v222
    %686 = vmatpush1.msra.mxu0 %v221
    %687 = vmatprep.subr.mxu0 %v220
    %688 = vmatpush1.msra.mxu0 %v219
    %689 = vmatprep.subr.mxu0 %v282
    %690 = vmatpush2.msra.mxu0 %v281
    %691 = vmatprep.subr.mxu0 %v280
    %692 = vmatpush2.msra.mxu0 %v279
    %693 = vmatprep.subr.mxu0 %v278
    %694 = vmatpush2.msra.mxu0 %v277
    %695 = vmatprep.subr.mxu0 %v276
    %696 = vmatpush2.msra.mxu0 %v275
    %697 = vmatprep.subr.mxu0 %v274
    %698 = vmatpush2.msra.mxu0 %v273
    %699 = vmatprep.subr.mxu0 %v272
    %700 = vmatpush2.msra.mxu0 %v271
    %701 = vmatprep.subr.mxu0 %v270
    %702 = vmatpush2.msra.mxu0 %v269
    %703 = vmatprep.subr.mxu0 %v268
    %704 = vmatpush2.msra.mxu0 %v267
    %705 = vmatprep.subr.mxu0 %v266
    %706 = vmatpush2.msra.mxu0 %v265
    %707 = vmatprep.subr.mxu0 %v264
    %708 = vmatpush2.msra.mxu0 %v263
    %709 = vmatprep.subr.mxu0 %v262
    %710 = vmatpush2.msra.mxu0 %v261
    %711 = vmatprep.subr.mxu0 %v260
    %712 = vmatpush2.msra.mxu0 %v259
    %713 = vmatprep.subr.mxu0 %v258
    %714 = vmatpush2.msra.mxu0 %v257
    %715 = vmatprep.subr.mxu0 %v256
    %716 = vmatpush2.msra.mxu0 %v255
    %717 = vmatprep.subr.mxu0 %v254
    %718 = vmatpush2.msra.mxu0 %v253
    %719 = vmatprep.subr.mxu0 %v252
    %720 = vmatpush2.msra.mxu0 %v251
    %721 = vmatprep.mubr.f32.mxu0 %v643
    %722 = vmatmul.mubr.f32.gmra.mxu0 %v642
    %v723 = vpop.f32.mrf.mxu0
    %v724 = vadd.f32 %v650, %v723
    %v725 = vpop.f32.mrf.mxu0
    %v726 = vadd.f32 %v654, %v725
    %727 = vmatprep.mubr.f32.mxu0 %v645
    %728 = vmatmul.mubr.f32.gmra.mxu0 %v644
    %v729 = vpop.f32.mrf.mxu0
    %v730 = vadd.f32 %v650, %v729
    %v731 = vpop.f32.mrf.mxu0
    %v732 = vadd.f32 %v654, %v731
    %733 = vdwg.mxu0
    %vm734 = vcmp.gt.f32.partialorder %v724, 0.0
    %vm735 = vcmp.gt.f32.partialorder %v726, 0.0
    %vm736 = vcmp.gt.f32.partialorder %v730, 0.0
    %vm737 = vcmp.gt.f32.partialorder %v732, 0.0
    %v738 = vmul.f32 %v724, 0.01
    %v739 = vmul.f32 %v726, 0.01
    %v740 = vmul.f32 %v730, 0.01
    %v741 = vmul.f32 %v732, 0.01
    %v742 = vsel %vm734, %v724, %v738
    %v743 = vsel %vm735, %v726, %v739
    %v744 = vsel %vm736, %v730, %v740
    %v745 = vsel %vm737, %v732, %v741
    %v746 = vadd.f32 %v742, %v743
    %747 = vadd.xlane.f32.xlu0 %v746
    %v748 = vpop.xlane.xlu0 %747
    %v749 = vadd.f32 %v744, %v745
    %750 = vadd.xlane.f32.xlu0 %v749
    %v751 = vpop.xlane.xlu0 %750
    %v752 = vmul.f32 %v742, %v742
    %v753 = vmul.f32 %v743, %v743
    %v754 = vmul.f32 %v744, %v744
    %v755 = vmul.f32 %v745, %v745
    %v756 = vadd.f32 %v752, %v753
    %757 = vadd.xlane.f32.xlu0 %v756
    %v758 = vpop.xlane.xlu0 %757
    %v759 = vadd.f32 %v754, %v755
    %760 = vadd.xlane.f32.xlu0 %v759
    %v761 = vpop.xlane.xlu0 %760
    %v762 = vmul.f32 %v748, 0.00390625
    %v763 = vmul.f32 %v751, 0.00390625
    %v764 = vmul.f32 %v758, 0.00390625
    %v765 = vmul.f32 %v761, 0.00390625
    %v766 = vmul.f32 %v762, %v762
    %v767 = vmul.f32 %v763, %v763
    %v768 = vsub.f32 %v764, %v766
    %v769 = vsub.f32 %v765, %v767
    %v770 = vmax.f32 %v768, 0.0
    %v771 = vmax.f32 %v769, 0.0
    %v772 = vadd.f32 %v770, 1e-05
    %v773 = vadd.f32 %v771, 1e-05
    %v774 = vrsqrt.pop %v772
    %v775 = vrsqrt.pop %v773
    %v776 = vsub.f32 %v742, %v762
    %v777 = vsub.f32 %v743, %v762
    %v778 = vsub.f32 %v744, %v763
    %v779 = vsub.f32 %v745, %v763
    %v781 = vlaneseq
    %v782 = vshrl.u32 %v781, 7
    %v783 = vsub.s32 0, %v782
    %v784 = vrot.slane %v284, %v783
    %v785 = vlaneseq
    %v786 = vshrl.u32 %v785, 7
    %v787 = vsub.s32 1, %v786
    %v788 = vrot.slane %v284, %v787
    %v791 = vmul.f32 %v784, %v774
    %v792 = vmul.f32 %v788, %v774
    %v793 = vmul.f32 %v784, %v775
    %v794 = vmul.f32 %v788, %v775
    %v795 = vmul.f32 %v776, %v791
    %v796 = vmul.f32 %v777, %v792
    %v797 = vmul.f32 %v778, %v793
    %v798 = vmul.f32 %v779, %v794
    %v800 = vlaneseq
    %v801 = vshrl.u32 %v800, 7
    %v802 = vsub.s32 0, %v801
    %v803 = vrot.slane %v285, %v802
    %v804 = vlaneseq
    %v805 = vshrl.u32 %v804, 7
    %v806 = vsub.s32 1, %v805
    %v807 = vrot.slane %v285, %v806
    %v810 = vadd.f32 %v795, %v803
    %v811 = vadd.f32 %v796, %v807
    %v812 = vadd.f32 %v797, %v803
    %v813 = vadd.f32 %v798, %v807
    %v815 = vlaneseq
    %v816 = vshrl.u32 %v815, 7
    %v817 = vsub.s32 0, %v816
    %v818 = vrot.slane %v318, %v817
    %820 = vmatprep.subr.mxu0 0.0
    %821 = vmatpush1.msra.mxu0 %v301
    %822 = vmatprep.subr.mxu0 0.0
    %823 = vmatpush1.msra.mxu0 %v300
    %824 = vmatprep.subr.mxu0 0.0
    %825 = vmatpush1.msra.mxu0 %v299
    %826 = vmatprep.subr.mxu0 0.0
    %827 = vmatpush1.msra.mxu0 %v298
    %828 = vmatprep.subr.mxu0 0.0
    %829 = vmatpush1.msra.mxu0 %v297
    %830 = vmatprep.subr.mxu0 0.0
    %831 = vmatpush1.msra.mxu0 %v296
    %832 = vmatprep.subr.mxu0 0.0
    %833 = vmatpush1.msra.mxu0 %v295
    %834 = vmatprep.subr.mxu0 0.0
    %835 = vmatpush1.msra.mxu0 %v294
    %836 = vmatprep.subr.mxu0 0.0
    %837 = vmatpush1.msra.mxu0 %v293
    %838 = vmatprep.subr.mxu0 0.0
    %839 = vmatpush1.msra.mxu0 %v292
    %840 = vmatprep.subr.mxu0 0.0
    %841 = vmatpush1.msra.mxu0 %v291
    %842 = vmatprep.subr.mxu0 0.0
    %843 = vmatpush1.msra.mxu0 %v290
    %844 = vmatprep.subr.mxu0 0.0
    %845 = vmatpush1.msra.mxu0 %v289
    %846 = vmatprep.subr.mxu0 0.0
    %847 = vmatpush1.msra.mxu0 %v288
    %848 = vmatprep.subr.mxu0 0.0
    %849 = vmatpush1.msra.mxu0 %v287
    %850 = vmatprep.subr.mxu0 0.0
    %851 = vmatpush1.msra.mxu0 %v286
    %852 = vmatprep.subr.mxu0 0.0
    %853 = vmatpush2.msra.mxu0 %v317
    %854 = vmatprep.subr.mxu0 0.0
    %855 = vmatpush2.msra.mxu0 %v316
    %856 = vmatprep.subr.mxu0 0.0
    %857 = vmatpush2.msra.mxu0 %v315
    %858 = vmatprep.subr.mxu0 0.0
    %859 = vmatpush2.msra.mxu0 %v314
    %860 = vmatprep.subr.mxu0 0.0
    %861 = vmatpush2.msra.mxu0 %v313
    %862 = vmatprep.subr.mxu0 0.0
    %863 = vmatpush2.msra.mxu0 %v312
    %864 = vmatprep.subr.mxu0 0.0
    %865 = vmatpush2.msra.mxu0 %v311
    %866 = vmatprep.subr.mxu0 0.0
    %867 = vmatpush2.msra.mxu0 %v310
    %868 = vmatprep.subr.mxu0 0.0
    %869 = vmatpush2.msra.mxu0 %v309
    %870 = vmatprep.subr.mxu0 0.0
    %871 = vmatpush2.msra.mxu0 %v308
    %872 = vmatprep.subr.mxu0 0.0
    %873 = vmatpush2.msra.mxu0 %v307
    %874 = vmatprep.subr.mxu0 0.0
    %875 = vmatpush2.msra.mxu0 %v306
    %876 = vmatprep.subr.mxu0 0.0
    %877 = vmatpush2.msra.mxu0 %v305
    %878 = vmatprep.subr.mxu0 0.0
    %879 = vmatpush2.msra.mxu0 %v304
    %880 = vmatprep.subr.mxu0 0.0
    %881 = vmatpush2.msra.mxu0 %v303
    %882 = vmatprep.subr.mxu0 0.0
    %883 = vmatpush2.msra.mxu0 %v302
    %884 = vmatprep.mubr.f32.mxu0 %v811
    %885 = vmatmul.mubr.f32.gmra.mxu0 %v810
    %v886 = vpop.f32.mrf.mxu0
    %v887 = vadd.f32 %v818, %v886
    %v888 = vpop.f32.mrf.mxu0
    %889 = vmatprep.mubr.f32.mxu0 %v813
    %890 = vmatmul.mubr.f32.gmra.mxu0 %v812
    %v891 = vpop.f32.mrf.mxu0
    %v892 = vadd.f32 %v818, %v891
    %v893 = vpop.f32.mrf.mxu0
    %894 = vdwg.mxu0
    %vm895 = vcmp.gt.f32.partialorder %v887, 0.0
    %vm896 = vcmp.gt.f32.partialorder %v892, 0.0
    %v897 = vmul.f32 %v887, 0.01
    %v898 = vmul.f32 %v892, 0.01
    %v899 = vsel %vm895, %v887, %v897
    %v900 = vsel %vm896, %v892, %v898
    %901 = vadd.xlane.f32.xlu0 %v899
    %v902 = vpop.xlane.xlu0 %901
    %903 = vadd.xlane.f32.xlu0 %v900
    %v904 = vpop.xlane.xlu0 %903
    %v905 = vmul.f32 %v899, %v899
    %v906 = vmul.f32 %v900, %v900
    %907 = vadd.xlane.f32.xlu0 %v905
    %v908 = vpop.xlane.xlu0 %907
    %909 = vadd.xlane.f32.xlu0 %v906
    %v910 = vpop.xlane.xlu0 %909
    %v911 = vmul.f32 %v902, 0.015625
    %v912 = vmul.f32 %v904, 0.015625
    %v913 = vmul.f32 %v908, 0.015625
    %v914 = vmul.f32 %v910, 0.015625
    %v915 = vmul.f32 %v911, %v911
    %v916 = vmul.f32 %v912, %v912
    %v917 = vsub.f32 %v913, %v915
    %v918 = vsub.f32 %v914, %v916
    %v919 = vmax.f32 %v917, 0.0
    %v920 = vmax.f32 %v918, 0.0
    %v921 = vadd.f32 %v919, 1e-05
    %v922 = vadd.f32 %v920, 1e-05
    %v923 = vrsqrt.pop %v921
    %v924 = vrsqrt.pop %v922
    %v925 = vsub.f32 %v899, %v911
    %v926 = vsub.f32 %v900, %v912
    %v928 = vlaneseq
    %v929 = vshrl.u32 %v928, 7
    %v930 = vsub.s32 0, %v929
    %v931 = vrot.slane %v319, %v930
    %v933 = vmul.f32 %v931, %v923
    %v934 = vmul.f32 %v931, %v924
    %v935 = vmul.f32 %v925, %v933
    %v936 = vmul.f32 %v926, %v934
    %v938 = vlaneseq
    %v939 = vshrl.u32 %v938, 7
    %v940 = vsub.s32 0, %v939
    %v941 = vrot.slane %v320, %v940
    %v943 = vadd.f32 %v935, %v941
    %v944 = vadd.f32 %v936, %v941
    %v946 = vlaneseq
    %v947 = vshrl.u32 %v946, 7
    %v948 = vsub.s32 0, %v947
    %v949 = vrot.slane %v337, %v948
    %951 = vmatprep.subr.mxu0 0.0
    %952 = vmatpush1.msra.mxu0 %v336
    %953 = vmatprep.subr.mxu0 0.0
    %954 = vmatpush1.msra.mxu0 %v335
    %955 = vmatprep.subr.mxu0 0.0
    %956 = vmatpush1.msra.mxu0 %v334
    %957 = vmatprep.subr.mxu0 0.0
    %958 = vmatpush1.msra.mxu0 %v333
    %959 = vmatprep.subr.mxu0 0.0
    %960 = vmatpush1.msra.mxu0 %v332
    %961 = vmatprep.subr.mxu0 0.0
    %962 = vmatpush1.msra.mxu0 %v331
    %963 = vmatprep.subr.mxu0 0.0
    %964 = vmatpush1.msra.mxu0 %v330
    %965 = vmatprep.subr.mxu0 0.0
    %966 = vmatpush1.msra.mxu0 %v329
    %967 = vmatprep.subr.mxu0 0.0
    %968 = vmatpush1.msra.mxu0 %v328
    %969 = vmatprep.subr.mxu0 0.0
    %970 = vmatpush1.msra.mxu0 %v327
    %971 = vmatprep.subr.mxu0 0.0
    %972 = vmatpush1.msra.mxu0 %v326
    %973 = vmatprep.subr.mxu0 0.0
    %974 = vmatpush1.msra.mxu0 %v325
    %975 = vmatprep.subr.mxu0 0.0
    %976 = vmatpush1.msra.mxu0 %v324
    %977 = vmatprep.subr.mxu0 0.0
    %978 = vmatpush1.msra.mxu0 %v323
    %979 = vmatprep.subr.mxu0 0.0
    %980 = vmatpush1.msra.mxu0 %v322
    %981 = vmatprep.subr.mxu0 0.0
    %982 = vmatpush1.msra.mxu0 %v321
    %983 = vmatprep.subr.mxu0 0.0
    %984 = vmatpush2.msra.mxu0 0.0
    %985 = vmatprep.subr.mxu0 0.0
    %986 = vmatpush2.msra.mxu0 0.0
    %987 = vmatprep.subr.mxu0 0.0
    %988 = vmatpush2.msra.mxu0 0.0
    %989 = vmatprep.subr.mxu0 0.0
    %990 = vmatpush2.msra.mxu0 0.0
    %991 = vmatprep.subr.mxu0 0.0
    %992 = vmatpush2.msra.mxu0 0.0
    %993 = vmatprep.subr.mxu0 0.0
    %994 = vmatpush2.msra.mxu0 0.0
    %995 = vmatprep.subr.mxu0 0.0
    %996 = vmatpush2.msra.mxu0 0.0
    %997 = vmatprep.subr.mxu0 0.0
    %998 = vmatpush2.msra.mxu0 0.0
    %999 = vmatprep.subr.mxu0 0.0
    %1000 = vmatpush2.msra.mxu0 0.0
    %1001 = vmatprep.subr.mxu0 0.0
    %1002 = vmatpush2.msra.mxu0 0.0
    %1003 = vmatprep.subr.mxu0 0.0
    %1004 = vmatpush2.msra.mxu0 0.0
    %1005 = vmatprep.subr.mxu0 0.0
    %1006 = vmatpush2.msra.mxu0 0.0
    %1007 = vmatprep.subr.mxu0 0.0
    %1008 = vmatpush2.msra.mxu0 0.0
    %1009 = vmatprep.subr.mxu0 0.0
    %1010 = vmatpush2.msra.mxu0 0.0
    %1011 = vmatprep.subr.mxu0 0.0
    %1012 = vmatpush2.msra.mxu0 0.0
    %1013 = vmatprep.subr.mxu0 0.0
    %1014 = vmatpush2.msra.mxu0 0.0
    %1015 = vmatprep.mubr.f32.mxu0 0.0
    %1016 = vmatmul.mubr.f32.gmra.mxu0 %v943
    %v1017 = vpop.f32.mrf.mxu0
    %v1018 = vadd.f32 %v949, %v1017
    %v1019 = vpop.f32.mrf.mxu0
    %1020 = vmatprep.mubr.f32.mxu0 0.0
    %1021 = vmatmul.mubr.f32.gmra.mxu0 %v944
    %v1022 = vpop.f32.mrf.mxu0
    %v1023 = vadd.f32 %v949, %v1022
    %v1024 = vpop.f32.mrf.mxu0
    %1025 = vdwg.mxu0
    %1026 = vst [vmem:[#allocation17] sm:$0xff] %v1018
    %1027 = vst [vmem:[#allocation17 + $0x8] sm:$0xff] %v1023
    // Predicated region
    $region114: #{tpu_custom_call.1} parent=1 // pred_check
      _
    $region115: #{tpu_custom_call.1} parent=1 // pred_check_branch
      %1029 = sbr.rel (0) target = $region117
    $region116: #{tpu_custom_call.1} parent=1 // pred_region
      %s1031 = ssub.s32 256, 256
      %1032 = vsyncadd [#allocation4], %s1031
      %s1033 = sshll.u32 [#allocation17], 4
      %s1034 = int_to_ptr.vmem [resolvable:$true] %s1033
      %1039 = dma.vmem_to_hbm [thread:$0]  %s1034, 256, %s19, [#allocation4], 128, 128, 8
    $region117: #{tpu_custom_call.1} parent=1 // pred_fallthru
      _
    // Predicated region
    $region118: #{tpu_custom_call.1} parent=1 // pred_check
      _
    $region119: #{tpu_custom_call.1} parent=1 // pred_check_branch
      %1041 = sbr.rel (0) target = $region121
    $region120: #{tpu_custom_call.1} parent=1 // pred_region
      %1042 = dma.done [#allocation4], 256
    $region121: #{tpu_custom_call.1} parent=1 // pred_fallthru
      _
    %1043 = vsyncpa [#allocation3], 1
    %1044 = vsyncpa [#allocation6], 1
    %1045 = vsyncpa [#allocation9], 1
    %1046 = vsyncpa [#allocation12], 1
    %1047 = vsyncpa [#allocation15], 1
    %1048 = vsyncpa [#allocation4], 1

</llo_original>
